<compile_context>
chip_gen: v6e
topology: v6e:2x2x1
jax: 0.10.0
libtpu: 0.0.40
codegen_flags: <defaults>
</compile_context>

<pallas_src>
import functools

import jax
import jax.numpy as jnp
from jax.experimental import pallas as pl
from jax.experimental.pallas import tpu as pltpu

HIDDEN = 512
TILE_B = 128  # rows per grid step; multiple of 8, fills a 128-wide MXU pass


def policy_net_kernel(x_ref, w1_ref, b1_ref, w2_ref, b2_ref, w3_ref, b3_ref,
                      out_ref):
    # fc1 + ReLU  (bf16 operands, f32 accumulation; elementwise math in f32)
    h1 = jnp.dot(x_ref[...], w1_ref[...], preferred_element_type=jnp.float32)
    h1 = jnp.maximum(h1 + b1_ref[...], 0.0)

    # fc2 + ReLU
    h2 = jnp.dot(h1.astype(jnp.bfloat16), w2_ref[...],
                 preferred_element_type=jnp.float32)
    h2 = jnp.maximum(h2 + b2_ref[...], 0.0)

    # fc3 + Tanh (tanh maps to the EUP slot -> effectively free)
    h3 = jnp.dot(h2.astype(jnp.bfloat16), w3_ref[...],
                 preferred_element_type=jnp.float32)
    out_ref[...] = jnp.tanh(h3 + b3_ref[...]).astype(out_ref.dtype)


def _pad2d(x, rows, cols):
    r, c = x.shape
    return jnp.pad(x, ((0, rows - r), (0, cols - c)))


def _round_up(n, m):
    return ((n + m - 1) // m) * m


@functools.partial(jax.jit, static_argnames=("o_dim", "a_dim"))
def _forward_impl(o, params, *, o_dim, a_dim):
    B = o.shape[0]
    k_pad = _round_up(o_dim, 128)      # lane-dense contraction dim for fc1
    n_pad = _round_up(a_dim, 128)      # lane-dense output dim for fc3
    b_pad = _round_up(max(B, 1), TILE_B)

    # Lane-dense, bf16 operands for the MXU (zero padding is exact for matmul).
    x_p = _pad2d(o, b_pad, k_pad).astype(jnp.bfloat16)
    w1_p = _pad2d(params["w1"], k_pad, HIDDEN).astype(jnp.bfloat16)
    w2_p = params["w2"].astype(jnp.bfloat16)
    w3_p = _pad2d(params["w3"], HIDDEN, n_pad).astype(jnp.bfloat16)
    b1 = params["b1"]                                  # (1, 512)  f32
    b2 = params["b2"]                                  # (1, 512)  f32
    b3_p = _pad2d(params["b3"], 1, n_pad)              # (1, n_pad) f32

    grid = (b_pad // TILE_B,)

    out_padded = pl.pallas_call(
        policy_net_kernel,
        out_shape=jax.ShapeDtypeStruct((b_pad, n_pad), jnp.float32),
        grid_spec=pltpu.PrefetchScalarGridSpec(
            num_scalar_prefetch=0,
            grid=grid,
            in_specs=[
                pl.BlockSpec((TILE_B, k_pad), lambda i: (i, 0)),      # x tile
                pl.BlockSpec((k_pad, HIDDEN), lambda i: (0, 0)),      # w1 (resident)
                pl.BlockSpec((1, HIDDEN), lambda i: (0, 0)),          # b1
                pl.BlockSpec((HIDDEN, HIDDEN), lambda i: (0, 0)),     # w2
                pl.BlockSpec((1, HIDDEN), lambda i: (0, 0)),          # b2
                pl.BlockSpec((HIDDEN, n_pad), lambda i: (0, 0)),      # w3
                pl.BlockSpec((1, n_pad), lambda i: (0, 0)),           # b3
            ],
            out_specs=pl.BlockSpec((TILE_B, n_pad), lambda i: (i, 0)),
        ),
        compiler_params=pltpu.CompilerParams(
            dimension_semantics=("parallel",)),
    )(x_p, w1_p, b1, w2_p, b2, w3_p, b3_p)

    return out_padded[:B, :a_dim]


def policy_net_forward(o, params):
    """o: (B, o_dim) float32. params: dict of w1,b1,w2,b2,w3,b3 (f32, (in,out))."""
    o_dim = params["w1"].shape[0]
    a_dim = params["w3"].shape[1]
    return _forward_impl(o, params, o_dim=o_dim, a_dim=a_dim)


def init_params(key, o_dim, a_dim, hidden=HIDDEN):
    """Deterministic init mimicking PyTorch's default Linear init
    (uniform +/- 1/sqrt(fan_in)). Weights stored as (in, out)."""
    def linear(key, fan_in, fan_out):
        kw, kb = jax.random.split(key)
        bound = 1.0 / jnp.sqrt(jnp.float32(fan_in))
        w = jax.random.uniform(kw, (fan_in, fan_out), jnp.float32,
                               minval=-bound, maxval=bound)
        b = jax.random.uniform(kb, (1, fan_out), jnp.float32,
                               minval=-bound, maxval=bound)
        return w, b

    k1, k2, k3 = jax.random.split(key, 3)
    w1, b1 = linear(k1, o_dim, hidden)
    w2, b2 = linear(k2, hidden, hidden)
    w3, b3 = linear(k3, hidden, a_dim)
    return {"w1": w1, "b1": b1, "w2": w2, "b2": b2, "w3": w3, "b3": b3}


def policy_net_ref_f32(o, p):
    """Pure-f32 reference (matches the PyTorch module exactly)."""
    h = jnp.maximum(o @ p["w1"] + p["b1"], 0.0)
    h = jnp.maximum(h @ p["w2"] + p["b2"], 0.0)
    return jnp.tanh(h @ p["w3"] + p["b3"])


def policy_net_ref_bf16(o, p):
    """Reference emulating the kernel's bf16-operand / f32-accumulate math."""
    bf = lambda a: a.astype(jnp.bfloat16).astype(jnp.float32)
    h = jnp.maximum(bf(o) @ bf(p["w1"]) + p["b1"], 0.0)
    h = jnp.maximum(bf(h) @ bf(p["w2"]) + p["b2"], 0.0)
    return jnp.tanh(bf(h) @ bf(p["w3"]) + p["b3"])


if __name__ == "__main__":
    key = jax.random.PRNGKey(0)
    k_params, k_obs = jax.random.split(key)

    B, O_DIM, A_DIM = 8, 64, 8   # small shapes consistent with the module
    params = init_params(k_params, O_DIM, A_DIM)
    obs = jax.random.normal(k_obs, (B, O_DIM), jnp.float32)

    out = policy_net_forward(obs, params)
    out = jax.block_until_ready(out)
    assert out.shape == (B, A_DIM)

    # Tight check against a reference that uses the same bf16-operand math.
    ref_bf16 = policy_net_ref_bf16(obs, params)
    assert jnp.allclose(out, ref_bf16, atol=5e-3, rtol=5e-3), (
        jnp.max(jnp.abs(out - ref_bf16)))

    # Looser semantic check against the exact f32 PyTorch-equivalent forward.
    ref_f32 = policy_net_ref_f32(obs, params)
    assert jnp.allclose(out, ref_f32, atol=5e-2, rtol=5e-2), (
        jnp.max(jnp.abs(out - ref_f32)))

    print("KERNEL_OK")
</pallas_src>

<mosaic_0001>
module attributes {stable_mosaic.version = 11 : i64} {
  func.func @policy_net_kernel(%arg0: i32, %arg1: memref<128x128xbf16, #tpu.memory_space<vmem>>, %arg2: memref<128x512xbf16, #tpu.memory_space<vmem>>, %arg3: memref<1x512xf32, #tpu.memory_space<vmem>>, %arg4: memref<512x512xbf16, #tpu.memory_space<vmem>>, %arg5: memref<1x512xf32, #tpu.memory_space<vmem>>, %arg6: memref<512x128xbf16, #tpu.memory_space<vmem>>, %arg7: memref<1x128xf32, #tpu.memory_space<vmem>>, %arg8: memref<128x128xf32, #tpu.memory_space<vmem>>) attributes {dimension_semantics = [#tpu.dimension_semantics<parallel>], iteration_bounds = array<i64: 1>, scalar_prefetch = 0 : i64, scratch_operands = 0 : i64, tpu.core_type = #tpu.core_type<tc>, window_params = [{transform_indices = @transform_0, window_bounds = array<i64: 128, 128>}, {pipeline_mode = #tpu.pipeline_mode<synchronous>, transform_indices = @transform_1, window_bounds = array<i64: 128, 512>}, {pipeline_mode = #tpu.pipeline_mode<synchronous>, transform_indices = @transform_2, window_bounds = array<i64: 1, 512>}, {pipeline_mode = #tpu.pipeline_mode<synchronous>, transform_indices = @transform_3, window_bounds = array<i64: 512, 512>}, {pipeline_mode = #tpu.pipeline_mode<synchronous>, transform_indices = @transform_4, window_bounds = array<i64: 1, 512>}, {pipeline_mode = #tpu.pipeline_mode<synchronous>, transform_indices = @transform_5, window_bounds = array<i64: 512, 128>}, {pipeline_mode = #tpu.pipeline_mode<synchronous>, transform_indices = @transform_6, window_bounds = array<i64: 1, 128>}, {transform_indices = @transform_7, window_bounds = array<i64: 128, 128>}]} {
    %c0 = arith.constant 0 : index
    %c0_0 = arith.constant 0 : index
    %0 = vector.load %arg1[%c0, %c0_0] : memref<128x128xbf16, #tpu.memory_space<vmem>>, vector<128x128xbf16>
    %c0_1 = arith.constant 0 : index
    %c0_2 = arith.constant 0 : index
    %1 = vector.load %arg2[%c0_1, %c0_2] : memref<128x512xbf16, #tpu.memory_space<vmem>>, vector<128x512xbf16>
    %cst = arith.constant dense<0.000000e+00> : vector<128x512xf32>
    %2 = tpu.matmul %0, %1, %cst {dimension_numbers = #tpu.dot_dimension_numbers<[1], [0], [0], [1], [0, 0, 1, 1], [], []>} : vector<128x128xbf16>, vector<128x512xbf16>, vector<128x512xf32> -> vector<128x512xf32>
    %c0_3 = arith.constant 0 : index
    %c0_4 = arith.constant 0 : index
    %3 = vector.load %arg3[%c0_3, %c0_4] : memref<1x512xf32, #tpu.memory_space<vmem>>, vector<1x512xf32>
    %4 = vector.broadcast %3 : vector<1x512xf32> to vector<128x512xf32>
    %5 = arith.addf %2, %4 : vector<128x512xf32>
    %cst_5 = arith.constant 0.000000e+00 : f32
    %6 = vector.broadcast %cst_5 : f32 to vector<128x512xf32>
    %7 = arith.maximumf %5, %6 : vector<128x512xf32>
    %8 = arith.truncf %7 : vector<128x512xf32> to vector<128x512xbf16>
    %c0_6 = arith.constant 0 : index
    %c0_7 = arith.constant 0 : index
    %9 = vector.load %arg4[%c0_6, %c0_7] : memref<512x512xbf16, #tpu.memory_space<vmem>>, vector<512x512xbf16>
    %cst_8 = arith.constant dense<0.000000e+00> : vector<128x512xf32>
    %10 = tpu.matmul %8, %9, %cst_8 {dimension_numbers = #tpu.dot_dimension_numbers<[1], [0], [0], [1], [0, 0, 1, 1], [], []>} : vector<128x512xbf16>, vector<512x512xbf16>, vector<128x512xf32> -> vector<128x512xf32>
    %c0_9 = arith.constant 0 : index
    %c0_10 = arith.constant 0 : index
    %11 = vector.load %arg5[%c0_9, %c0_10] : memref<1x512xf32, #tpu.memory_space<vmem>>, vector<1x512xf32>
    %12 = vector.broadcast %11 : vector<1x512xf32> to vector<128x512xf32>
    %13 = arith.addf %10, %12 : vector<128x512xf32>
    %cst_11 = arith.constant 0.000000e+00 : f32
    %14 = vector.broadcast %cst_11 : f32 to vector<128x512xf32>
    %15 = arith.maximumf %13, %14 : vector<128x512xf32>
    %16 = arith.truncf %15 : vector<128x512xf32> to vector<128x512xbf16>
    %c0_12 = arith.constant 0 : index
    %c0_13 = arith.constant 0 : index
    %17 = vector.load %arg6[%c0_12, %c0_13] : memref<512x128xbf16, #tpu.memory_space<vmem>>, vector<512x128xbf16>
    %cst_14 = arith.constant dense<0.000000e+00> : vector<128x128xf32>
    %18 = tpu.matmul %16, %17, %cst_14 {dimension_numbers = #tpu.dot_dimension_numbers<[1], [0], [0], [1], [0, 0, 1, 1], [], []>} : vector<128x512xbf16>, vector<512x128xbf16>, vector<128x128xf32> -> vector<128x128xf32>
    %c0_15 = arith.constant 0 : index
    %c0_16 = arith.constant 0 : index
    %19 = vector.load %arg7[%c0_15, %c0_16] : memref<1x128xf32, #tpu.memory_space<vmem>>, vector<1x128xf32>
    %20 = vector.broadcast %19 : vector<1x128xf32> to vector<128x128xf32>
    %21 = arith.addf %18, %20 : vector<128x128xf32>
    %22 = math.tanh %21 : vector<128x128xf32>
    %c0_17 = arith.constant 0 : index
    %c0_18 = arith.constant 0 : index
    %23 = vector.load %arg8[%c0_17, %c0_18] : memref<128x128xf32, #tpu.memory_space<vmem>>, vector<128x128xf32>
    tpu.vector_store %arg8[%c0_17, %c0_18], %22 {strides = array<i32>} : memref<128x128xf32, #tpu.memory_space<vmem>>, vector<128x128xf32>,
    return
  }
  func.func @transform_0(%arg0: i32) -> (i32, i32) {
    %c0_i32 = arith.constant 0 : i32
    %c0_i32_0 = arith.constant 0 : i32
    return %arg0, %c0_i32 : i32, i32
  }
  func.func @transform_1(%arg0: i32) -> (i32, i32) {
    %c0_i32 = arith.constant 0 : i32
    %c0_i32_0 = arith.constant 0 : i32
    %c0_i32_1 = arith.constant 0 : i32
    return %c0_i32, %c0_i32_0 : i32, i32
  }
  func.func @transform_2(%arg0: i32) -> (i32, i32) {
    %c0_i32 = arith.constant 0 : i32
    %c0_i32_0 = arith.constant 0 : i32
    %c0_i32_1 = arith.constant 0 : i32
    return %c0_i32, %c0_i32_0 : i32, i32
  }
  func.func @transform_3(%arg0: i32) -> (i32, i32) {
    %c0_i32 = arith.constant 0 : i32
    %c0_i32_0 = arith.constant 0 : i32
    %c0_i32_1 = arith.constant 0 : i32
    return %c0_i32, %c0_i32_0 : i32, i32
  }
  func.func @transform_4(%arg0: i32) -> (i32, i32) {
    %c0_i32 = arith.constant 0 : i32
    %c0_i32_0 = arith.constant 0 : i32
    %c0_i32_1 = arith.constant 0 : i32
    return %c0_i32, %c0_i32_0 : i32, i32
  }
  func.func @transform_5(%arg0: i32) -> (i32, i32) {
    %c0_i32 = arith.constant 0 : i32
    %c0_i32_0 = arith.constant 0 : i32
    %c0_i32_1 = arith.constant 0 : i32
    return %c0_i32, %c0_i32_0 : i32, i32
  }
  func.func @transform_6(%arg0: i32) -> (i32, i32) {
    %c0_i32 = arith.constant 0 : i32
    %c0_i32_0 = arith.constant 0 : i32
    %c0_i32_1 = arith.constant 0 : i32
    return %c0_i32, %c0_i32_0 : i32, i32
  }
  func.func @transform_7(%arg0: i32) -> (i32, i32) {
    %c0_i32 = arith.constant 0 : i32
    %c0_i32_0 = arith.constant 0 : i32
    return %arg0, %c0_i32 : i32, i32
  }
}

</mosaic_0001>

<llo_original>
// kernel: _forward_impl.1
$region0: #{_forward_impl.1}
  #allocation0 [shape = 'u32[]', space=smem, size = 0x4, offset = 0x4, fixed_abs, tag = 'smem constant byte address 0x4 - core index']
  #allocation1 [shape = 'u32[144,128]{1,0:T(1,128)}', space=vmem, size = 0x12000, scoped, tag = 'internal scratch']
  %s0 = inlined_call_operand.vmem [shape: bf16[128,128], index: 0, kind: input, shape index: {}]
  %s1 = inlined_call_operand.vmem [shape: bf16[128,512], index: 1, kind: input, shape index: {}]
  %s2 = inlined_call_operand.vmem [shape: f32[1,512], index: 2, kind: input, shape index: {}]
  %s3 = inlined_call_operand.vmem [shape: bf16[512,512], index: 3, kind: input, shape index: {}]
  %s4 = inlined_call_operand.vmem [shape: f32[1,512], index: 4, kind: input, shape index: {}]
  %s5 = inlined_call_operand.vmem [shape: bf16[512,128], index: 5, kind: input, shape index: {}]
  %s6 = inlined_call_operand.vmem [shape: f32[1,128], index: 6, kind: input, shape index: {}]
  %s7 = inlined_call_operand.vmem [shape: f32[128,128], index: 7, kind: output, shape index: {}]
  %s8 = sld [smem:[#allocation0]]
  $region38: #{_forward_impl.1} parent=0
    _
  %s10 = ssub.s32 1, %s8
  %s11 = scalar_select 0, %s10, %s8
  // Predicated region
  $region2: #{_forward_impl.1} parent=0 // pred_check
    _
  $region3: #{_forward_impl.1} parent=0 // pred_check_branch
    %13 = sbr.rel (0) target = $region5
  $region4: #{_forward_impl.1} parent=0 // pred_region
    _
  $region5: #{_forward_impl.1} parent=0 // pred_fallthru
    _
  // Predicated region
  $region6: #{_forward_impl.1} parent=0 // pred_check
    _
  $region7: #{_forward_impl.1} parent=0 // pred_check_branch
    %15 = sbr.rel (0) target = $region9
  $region8: #{_forward_impl.1} parent=0 // pred_region
    _
  $region9: #{_forward_impl.1} parent=0 // pred_fallthru
    _
  // Predicated region
  $region10: #{_forward_impl.1} parent=0 // pred_check
    _
  $region11: #{_forward_impl.1} parent=0 // pred_check_branch
    %17 = sbr.rel (0) target = $region13
  $region12: #{_forward_impl.1} parent=0 // pred_region
    _
  $region13: #{_forward_impl.1} parent=0 // pred_fallthru
    _
  // Predicated region
  $region14: #{_forward_impl.1} parent=0 // pred_check
    _
  $region15: #{_forward_impl.1} parent=0 // pred_check_branch
    %19 = sbr.rel (0) target = $region17
  $region16: #{_forward_impl.1} parent=0 // pred_region
    _
  $region17: #{_forward_impl.1} parent=0 // pred_fallthru
    _
  // Predicated region
  $region18: #{_forward_impl.1} parent=0 // pred_check
    _
  $region19: #{_forward_impl.1} parent=0 // pred_check_branch
    %21 = sbr.rel (0) target = $region21
  $region20: #{_forward_impl.1} parent=0 // pred_region
    _
  $region21: #{_forward_impl.1} parent=0 // pred_fallthru
    _
  // Predicated region
  $region22: #{_forward_impl.1} parent=0 // pred_check
    _
  $region23: #{_forward_impl.1} parent=0 // pred_check_branch
    %23 = sbr.rel (0) target = $region25
  $region24: #{_forward_impl.1} parent=0 // pred_region
    _
  $region25: #{_forward_impl.1} parent=0 // pred_fallthru
    _
  // Predicated region
  $region26: #{_forward_impl.1} parent=0 // pred_check
    _
  $region27: #{_forward_impl.1} parent=0 // pred_check_branch
    %25 = sbr.rel (0) target = $region29
  $region28: #{_forward_impl.1} parent=0 // pred_region
    _
  $region29: #{_forward_impl.1} parent=0 // pred_fallthru
    _
  %v27 = vld [vmem:[%s0] sm:$0xf]
  %v28 = vld [vmem:[%s0 + $0x4] sm:$0xf]
  %v29 = vld [vmem:[%s0 + $0x8] sm:$0xf]
  %v30 = vld [vmem:[%s0 + $0xc] sm:$0xf]
  %v31 = vld [vmem:[%s0 + $0x10] sm:$0xf]
  %v32 = vld [vmem:[%s0 + $0x14] sm:$0xf]
  %v33 = vld [vmem:[%s0 + $0x18] sm:$0xf]
  %v34 = vld [vmem:[%s0 + $0x1c] sm:$0xf]
  %v35 = vld [vmem:[%s0 + $0x20] sm:$0xf]
  %v36 = vld [vmem:[%s0 + $0x24] sm:$0xf]
  %v37 = vld [vmem:[%s0 + $0x28] sm:$0xf]
  %v38 = vld [vmem:[%s0 + $0x2c] sm:$0xf]
  %v39 = vld [vmem:[%s0 + $0x30] sm:$0xf]
  %v40 = vld [vmem:[%s0 + $0x34] sm:$0xf]
  %v41 = vld [vmem:[%s0 + $0x38] sm:$0xf]
  %v42 = vld [vmem:[%s0 + $0x3c] sm:$0xf]
  %v43 = vld [vmem:[%s1] sm:$0xff]
  %v44 = vld [vmem:[%s1 + $0x8] sm:$0xff]
  %v45 = vld [vmem:[%s1 + $0x10] sm:$0xff]
  %v46 = vld [vmem:[%s1 + $0x18] sm:$0xff]
  %v47 = vld [vmem:[%s1 + $0x20] sm:$0xff]
  %v48 = vld [vmem:[%s1 + $0x28] sm:$0xff]
  %v49 = vld [vmem:[%s1 + $0x30] sm:$0xff]
  %v50 = vld [vmem:[%s1 + $0x38] sm:$0xff]
  %v51 = vld [vmem:[%s1 + $0x40] sm:$0xff]
  %v52 = vld [vmem:[%s1 + $0x48] sm:$0xff]
  %v53 = vld [vmem:[%s1 + $0x50] sm:$0xff]
  %v54 = vld [vmem:[%s1 + $0x58] sm:$0xff]
  %v55 = vld [vmem:[%s1 + $0x60] sm:$0xff]
  %v56 = vld [vmem:[%s1 + $0x68] sm:$0xff]
  %v57 = vld [vmem:[%s1 + $0x70] sm:$0xff]
  %v58 = vld [vmem:[%s1 + $0x78] sm:$0xff]
  %v59 = vld [vmem:[%s1 + $0x80] sm:$0xff]
  %v60 = vld [vmem:[%s1 + $0x88] sm:$0xff]
  %v61 = vld [vmem:[%s1 + $0x90] sm:$0xff]
  %v62 = vld [vmem:[%s1 + $0x98] sm:$0xff]
  %v63 = vld [vmem:[%s1 + $0xa0] sm:$0xff]
  %v64 = vld [vmem:[%s1 + $0xa8] sm:$0xff]
  %v65 = vld [vmem:[%s1 + $0xb0] sm:$0xff]
  %v66 = vld [vmem:[%s1 + $0xb8] sm:$0xff]
  %v67 = vld [vmem:[%s1 + $0xc0] sm:$0xff]
  %v68 = vld [vmem:[%s1 + $0xc8] sm:$0xff]
  %v69 = vld [vmem:[%s1 + $0xd0] sm:$0xff]
  %v70 = vld [vmem:[%s1 + $0xd8] sm:$0xff]
  %v71 = vld [vmem:[%s1 + $0xe0] sm:$0xff]
  %v72 = vld [vmem:[%s1 + $0xe8] sm:$0xff]
  %v73 = vld [vmem:[%s1 + $0xf0] sm:$0xff]
  %v74 = vld [vmem:[%s1 + $0xf8] sm:$0xff]
  %v75 = vld [vmem:[%s2] sm:$0xf]
  %v77 = vlaneseq
  %v78 = vshrl.u32 %v77, 7
  %v79 = vsub.s32 0, %v78
  %v80 = vrot.slane %v75, %v79
  %v81 = vlaneseq
  %v82 = vshrl.u32 %v81, 7
  %v83 = vsub.s32 1, %v82
  %v84 = vrot.slane %v75, %v83
  %v85 = vlaneseq
  %v86 = vshrl.u32 %v85, 7
  %v87 = vsub.s32 2, %v86
  %v88 = vrot.slane %v75, %v87
  %v89 = vlaneseq
  %v90 = vshrl.u32 %v89, 7
  %v91 = vsub.s32 3, %v90
  %v92 = vrot.slane %v75, %v91
  %v113 = vunpack.c.l.b16 %v27
  %v114 = vunpack.c.l.b16 %v28
  %v115 = vunpack.c.l.b16 %v29
  %v116 = vunpack.c.l.b16 %v30
  %v117 = vunpack.c.l.b16 %v31
  %v118 = vunpack.c.l.b16 %v32
  %v119 = vunpack.c.l.b16 %v33
  %v120 = vunpack.c.l.b16 %v34
  %v121 = vunpack.c.l.b16 %v35
  %v122 = vunpack.c.l.b16 %v36
  %v123 = vunpack.c.l.b16 %v37
  %v124 = vunpack.c.l.b16 %v38
  %v125 = vunpack.c.l.b16 %v39
  %v126 = vunpack.c.l.b16 %v40
  %v127 = vunpack.c.l.b16 %v41
  %v128 = vunpack.c.l.b16 %v42
  %v129 = vpack.c.b16 %v114, %v113
  %v130 = vpack.c.b16 %v116, %v115
  %v131 = vpack.c.b16 %v118, %v117
  %v132 = vpack.c.b16 %v120, %v119
  %v133 = vpack.c.b16 %v122, %v121
  %v134 = vpack.c.b16 %v124, %v123
  %v135 = vpack.c.b16 %v126, %v125
  %v136 = vpack.c.b16 %v128, %v127
  %v177 = vunpack.c.l.b16 %v43
  %v178 = vunpack.c.h.b16 %v43
  %v179 = vunpack.c.l.b16 %v44
  %v180 = vunpack.c.h.b16 %v44
  %v181 = vunpack.c.l.b16 %v45
  %v182 = vunpack.c.h.b16 %v45
  %v183 = vunpack.c.l.b16 %v46
  %v184 = vunpack.c.h.b16 %v46
  %v185 = vunpack.c.l.b16 %v47
  %v186 = vunpack.c.h.b16 %v47
  %v187 = vunpack.c.l.b16 %v48
  %v188 = vunpack.c.h.b16 %v48
  %v189 = vunpack.c.l.b16 %v49
  %v190 = vunpack.c.h.b16 %v49
  %v191 = vunpack.c.l.b16 %v50
  %v192 = vunpack.c.h.b16 %v50
  %v193 = vunpack.c.l.b16 %v51
  %v194 = vunpack.c.h.b16 %v51
  %v195 = vunpack.c.l.b16 %v52
  %v196 = vunpack.c.h.b16 %v52
  %v197 = vunpack.c.l.b16 %v53
  %v198 = vunpack.c.h.b16 %v53
  %v199 = vunpack.c.l.b16 %v54
  %v200 = vunpack.c.h.b16 %v54
  %v201 = vunpack.c.l.b16 %v55
  %v202 = vunpack.c.h.b16 %v55
  %v203 = vunpack.c.l.b16 %v56
  %v204 = vunpack.c.h.b16 %v56
  %v205 = vunpack.c.l.b16 %v57
  %v206 = vunpack.c.h.b16 %v57
  %v207 = vunpack.c.l.b16 %v58
  %v208 = vunpack.c.h.b16 %v58
  %v209 = vunpack.c.l.b16 %v59
  %v210 = vunpack.c.h.b16 %v59
  %v211 = vunpack.c.l.b16 %v60
  %v212 = vunpack.c.h.b16 %v60
  %v213 = vunpack.c.l.b16 %v61
  %v214 = vunpack.c.h.b16 %v61
  %v215 = vunpack.c.l.b16 %v62
  %v216 = vunpack.c.h.b16 %v62
  %v217 = vunpack.c.l.b16 %v63
  %v218 = vunpack.c.h.b16 %v63
  %v219 = vunpack.c.l.b16 %v64
  %v220 = vunpack.c.h.b16 %v64
  %v221 = vunpack.c.l.b16 %v65
  %v222 = vunpack.c.h.b16 %v65
  %v223 = vunpack.c.l.b16 %v66
  %v224 = vunpack.c.h.b16 %v66
  %v225 = vunpack.c.l.b16 %v67
  %v226 = vunpack.c.h.b16 %v67
  %v227 = vunpack.c.l.b16 %v68
  %v228 = vunpack.c.h.b16 %v68
  %v229 = vunpack.c.l.b16 %v69
  %v230 = vunpack.c.h.b16 %v69
  %v231 = vunpack.c.l.b16 %v70
  %v232 = vunpack.c.h.b16 %v70
  %v233 = vunpack.c.l.b16 %v71
  %v234 = vunpack.c.h.b16 %v71
  %v235 = vunpack.c.l.b16 %v72
  %v236 = vunpack.c.h.b16 %v72
  %v237 = vunpack.c.l.b16 %v73
  %v238 = vunpack.c.h.b16 %v73
  %v239 = vunpack.c.l.b16 %v74
  %v240 = vunpack.c.h.b16 %v74
  %v241 = vpack.c.b16 %v181, %v177
  %v242 = vpack.c.b16 %v182, %v178
  %v243 = vpack.c.b16 %v183, %v179
  %v244 = vpack.c.b16 %v184, %v180
  %v245 = vpack.c.b16 %v189, %v185
  %v246 = vpack.c.b16 %v190, %v186
  %v247 = vpack.c.b16 %v191, %v187
  %v248 = vpack.c.b16 %v192, %v188
  %v249 = vpack.c.b16 %v197, %v193
  %v250 = vpack.c.b16 %v198, %v194
  %v251 = vpack.c.b16 %v199, %v195
  %v252 = vpack.c.b16 %v200, %v196
  %v253 = vpack.c.b16 %v205, %v201
  %v254 = vpack.c.b16 %v206, %v202
  %v255 = vpack.c.b16 %v207, %v203
  %v256 = vpack.c.b16 %v208, %v204
  %v257 = vpack.c.b16 %v213, %v209
  %v258 = vpack.c.b16 %v214, %v210
  %v259 = vpack.c.b16 %v215, %v211
  %v260 = vpack.c.b16 %v216, %v212
  %v261 = vpack.c.b16 %v221, %v217
  %v262 = vpack.c.b16 %v222, %v218
  %v263 = vpack.c.b16 %v223, %v219
  %v264 = vpack.c.b16 %v224, %v220
  %v265 = vpack.c.b16 %v229, %v225
  %v266 = vpack.c.b16 %v230, %v226
  %v267 = vpack.c.b16 %v231, %v227
  %v268 = vpack.c.b16 %v232, %v228
  %v269 = vpack.c.b16 %v237, %v233
  %v270 = vpack.c.b16 %v238, %v234
  %v271 = vpack.c.b16 %v239, %v235
  %v272 = vpack.c.b16 %v240, %v236
  %305 = vmatprep.subr.bf16.mxu0 %v270
  %306 = vmatpush1.bf16.msra.mxu0 %v269
  %307 = vmatprep.subr.bf16.mxu0 %v266
  %308 = vmatpush1.bf16.msra.mxu0 %v265
  %309 = vmatprep.subr.bf16.mxu0 %v262
  %310 = vmatpush1.bf16.msra.mxu0 %v261
  %311 = vmatprep.subr.bf16.mxu0 %v258
  %312 = vmatpush1.bf16.msra.mxu0 %v257
  %313 = vmatprep.subr.bf16.mxu0 %v254
  %314 = vmatpush1.bf16.msra.mxu0 %v253
  %315 = vmatprep.subr.bf16.mxu0 %v250
  %316 = vmatpush1.bf16.msra.mxu0 %v249
  %317 = vmatprep.subr.bf16.mxu0 %v246
  %318 = vmatpush1.bf16.msra.mxu0 %v245
  %319 = vmatprep.subr.bf16.mxu0 %v242
  %320 = vmatpush1.bf16.msra.mxu0 %v241
  %321 = vmatprep.subr.bf16.mxu0 0
  %322 = vmatpush2.bf16.msra.mxu0 0
  %323 = vmatprep.subr.bf16.mxu0 0
  %324 = vmatpush2.bf16.msra.mxu0 0
  %325 = vmatprep.subr.bf16.mxu0 0
  %326 = vmatpush2.bf16.msra.mxu0 0
  %327 = vmatprep.subr.bf16.mxu0 0
  %328 = vmatpush2.bf16.msra.mxu0 0
  %329 = vmatprep.subr.bf16.mxu0 0
  %330 = vmatpush2.bf16.msra.mxu0 0
  %331 = vmatprep.subr.bf16.mxu0 0
  %332 = vmatpush2.bf16.msra.mxu0 0
  %333 = vmatprep.subr.bf16.mxu0 0
  %334 = vmatpush2.bf16.msra.mxu0 0
  %335 = vmatprep.subr.bf16.mxu0 0
  %336 = vmatpush2.bf16.msra.mxu0 0
  %337 = vmatprep.mubr.bf16.mxu0 0
  %338 = vmatmul.mubr.bf16.gmra.mxu0 %v129
  %v339 = vpop.f32.mrf.mxu0
  %v340 = vadd.f32 %v80, %v339
  %v341 = vpop.f32.mrf.mxu0
  %v342 = vadd.f32 %v84, %v341
  %v343 = vpop.f32.mrf.mxu0
  %v344 = vadd.f32 %v80, %v343
  %v345 = vpop.f32.mrf.mxu0
  %v346 = vadd.f32 %v84, %v345
  %347 = vmatprep.mubr.bf16.mxu0 0
  %348 = vmatmul.mubr.bf16.gmra.mxu0 %v130
  %v349 = vpop.f32.mrf.mxu0
  %v350 = vadd.f32 %v80, %v349
  %v351 = vpop.f32.mrf.mxu0
  %v352 = vadd.f32 %v84, %v351
  %v353 = vpop.f32.mrf.mxu0
  %v354 = vadd.f32 %v80, %v353
  %v355 = vpop.f32.mrf.mxu0
  %v356 = vadd.f32 %v84, %v355
  %357 = vmatprep.mubr.bf16.mxu0 0
  %358 = vmatmul.mubr.bf16.gmra.mxu0 %v131
  %v359 = vpop.f32.mrf.mxu0
  %v360 = vadd.f32 %v80, %v359
  %v361 = vpop.f32.mrf.mxu0
  %v362 = vadd.f32 %v84, %v361
  %v363 = vpop.f32.mrf.mxu0
  %v364 = vadd.f32 %v80, %v363
  %v365 = vpop.f32.mrf.mxu0
  %v366 = vadd.f32 %v84, %v365
  %367 = vmatprep.mubr.bf16.mxu0 0
  %368 = vmatmul.mubr.bf16.gmra.mxu0 %v132
  %v369 = vpop.f32.mrf.mxu0
  %v370 = vadd.f32 %v80, %v369
  %v371 = vpop.f32.mrf.mxu0
  %v372 = vadd.f32 %v84, %v371
  %v373 = vpop.f32.mrf.mxu0
  %v374 = vadd.f32 %v80, %v373
  %v375 = vpop.f32.mrf.mxu0
  %v376 = vadd.f32 %v84, %v375
  %377 = vmatprep.mubr.bf16.mxu0 0
  %378 = vmatmul.mubr.bf16.gmra.mxu0 %v133
  %v379 = vpop.f32.mrf.mxu0
  %v380 = vadd.f32 %v80, %v379
  %v381 = vpop.f32.mrf.mxu0
  %v382 = vadd.f32 %v84, %v381
  %v383 = vpop.f32.mrf.mxu0
  %v384 = vadd.f32 %v80, %v383
  %v385 = vpop.f32.mrf.mxu0
  %v386 = vadd.f32 %v84, %v385
  %387 = vmatprep.mubr.bf16.mxu0 0
  %388 = vmatmul.mubr.bf16.gmra.mxu0 %v134
  %v389 = vpop.f32.mrf.mxu0
  %v390 = vadd.f32 %v80, %v389
  %v391 = vpop.f32.mrf.mxu0
  %v392 = vadd.f32 %v84, %v391
  %v393 = vpop.f32.mrf.mxu0
  %v394 = vadd.f32 %v80, %v393
  %v395 = vpop.f32.mrf.mxu0
  %v396 = vadd.f32 %v84, %v395
  %397 = vmatprep.mubr.bf16.mxu0 0
  %398 = vmatmul.mubr.bf16.gmra.mxu0 %v135
  %v399 = vpop.f32.mrf.mxu0
  %v400 = vadd.f32 %v80, %v399
  %v401 = vpop.f32.mrf.mxu0
  %v402 = vadd.f32 %v84, %v401
  %v403 = vpop.f32.mrf.mxu0
  %v404 = vadd.f32 %v80, %v403
  %v405 = vpop.f32.mrf.mxu0
  %v406 = vadd.f32 %v84, %v405
  %407 = vmatprep.mubr.bf16.mxu0 0
  %408 = vmatmul.mubr.bf16.gmra.mxu0 %v136
  %v409 = vpop.f32.mrf.mxu0
  %v410 = vadd.f32 %v80, %v409
  %v411 = vpop.f32.mrf.mxu0
  %v412 = vadd.f32 %v84, %v411
  %v413 = vpop.f32.mrf.mxu0
  %v414 = vadd.f32 %v80, %v413
  %v415 = vpop.f32.mrf.mxu0
  %v416 = vadd.f32 %v84, %v415
  %417 = vdwg.mxu0
  %418 = vmatprep.subr.bf16.mxu0 %v272
  %419 = vmatpush1.bf16.msra.mxu0 %v271
  %420 = vmatprep.subr.bf16.mxu0 %v268
  %421 = vmatpush1.bf16.msra.mxu0 %v267
  %422 = vmatprep.subr.bf16.mxu0 %v264
  %423 = vmatpush1.bf16.msra.mxu0 %v263
  %424 = vmatprep.subr.bf16.mxu0 %v260
  %425 = vmatpush1.bf16.msra.mxu0 %v259
  %426 = vmatprep.subr.bf16.mxu0 %v256
  %427 = vmatpush1.bf16.msra.mxu0 %v255
  %428 = vmatprep.subr.bf16.mxu0 %v252
  %429 = vmatpush1.bf16.msra.mxu0 %v251
  %430 = vmatprep.subr.bf16.mxu0 %v248
  %431 = vmatpush1.bf16.msra.mxu0 %v247
  %432 = vmatprep.subr.bf16.mxu0 %v244
  %433 = vmatpush1.bf16.msra.mxu0 %v243
  %434 = vmatprep.subr.bf16.mxu0 0
  %435 = vmatpush2.bf16.msra.mxu0 0
  %436 = vmatprep.subr.bf16.mxu0 0
  %437 = vmatpush2.bf16.msra.mxu0 0
  %438 = vmatprep.subr.bf16.mxu0 0
  %439 = vmatpush2.bf16.msra.mxu0 0
  %440 = vmatprep.subr.bf16.mxu0 0
  %441 = vmatpush2.bf16.msra.mxu0 0
  %442 = vmatprep.subr.bf16.mxu0 0
  %443 = vmatpush2.bf16.msra.mxu0 0
  %444 = vmatprep.subr.bf16.mxu0 0
  %445 = vmatpush2.bf16.msra.mxu0 0
  %446 = vmatprep.subr.bf16.mxu0 0
  %447 = vmatpush2.bf16.msra.mxu0 0
  %448 = vmatprep.subr.bf16.mxu0 0
  %449 = vmatpush2.bf16.msra.mxu0 0
  %450 = vmatprep.mubr.bf16.mxu0 0
  %451 = vmatmul.mubr.bf16.gmra.mxu0 %v129
  %v452 = vpop.f32.mrf.mxu0
  %v453 = vadd.f32 %v88, %v452
  %v454 = vpop.f32.mrf.mxu0
  %v455 = vadd.f32 %v92, %v454
  %v456 = vpop.f32.mrf.mxu0
  %v457 = vadd.f32 %v88, %v456
  %v458 = vpop.f32.mrf.mxu0
  %v459 = vadd.f32 %v92, %v458
  %460 = vmatprep.mubr.bf16.mxu0 0
  %461 = vmatmul.mubr.bf16.gmra.mxu0 %v130
  %v462 = vpop.f32.mrf.mxu0
  %v463 = vadd.f32 %v88, %v462
  %v464 = vpop.f32.mrf.mxu0
  %v465 = vadd.f32 %v92, %v464
  %v466 = vpop.f32.mrf.mxu0
  %v467 = vadd.f32 %v88, %v466
  %v468 = vpop.f32.mrf.mxu0
  %v469 = vadd.f32 %v92, %v468
  %470 = vmatprep.mubr.bf16.mxu0 0
  %471 = vmatmul.mubr.bf16.gmra.mxu0 %v131
  %v472 = vpop.f32.mrf.mxu0
  %v473 = vadd.f32 %v88, %v472
  %v474 = vpop.f32.mrf.mxu0
  %v475 = vadd.f32 %v92, %v474
  %v476 = vpop.f32.mrf.mxu0
  %v477 = vadd.f32 %v88, %v476
  %v478 = vpop.f32.mrf.mxu0
  %v479 = vadd.f32 %v92, %v478
  %480 = vmatprep.mubr.bf16.mxu0 0
  %481 = vmatmul.mubr.bf16.gmra.mxu0 %v132
  %v482 = vpop.f32.mrf.mxu0
  %v483 = vadd.f32 %v88, %v482
  %v484 = vpop.f32.mrf.mxu0
  %v485 = vadd.f32 %v92, %v484
  %v486 = vpop.f32.mrf.mxu0
  %v487 = vadd.f32 %v88, %v486
  %v488 = vpop.f32.mrf.mxu0
  %v489 = vadd.f32 %v92, %v488
  %490 = vmatprep.mubr.bf16.mxu0 0
  %491 = vmatmul.mubr.bf16.gmra.mxu0 %v133
  %v492 = vpop.f32.mrf.mxu0
  %v493 = vadd.f32 %v88, %v492
  %v494 = vpop.f32.mrf.mxu0
  %v495 = vadd.f32 %v92, %v494
  %v496 = vpop.f32.mrf.mxu0
  %v497 = vadd.f32 %v88, %v496
  %v498 = vpop.f32.mrf.mxu0
  %v499 = vadd.f32 %v92, %v498
  %500 = vmatprep.mubr.bf16.mxu0 0
  %501 = vmatmul.mubr.bf16.gmra.mxu0 %v134
  %v502 = vpop.f32.mrf.mxu0
  %v503 = vadd.f32 %v88, %v502
  %v504 = vpop.f32.mrf.mxu0
  %v505 = vadd.f32 %v92, %v504
  %v506 = vpop.f32.mrf.mxu0
  %v507 = vadd.f32 %v88, %v506
  %v508 = vpop.f32.mrf.mxu0
  %v509 = vadd.f32 %v92, %v508
  %510 = vmatprep.mubr.bf16.mxu0 0
  %511 = vmatmul.mubr.bf16.gmra.mxu0 %v135
  %v512 = vpop.f32.mrf.mxu0
  %v513 = vadd.f32 %v88, %v512
  %v514 = vpop.f32.mrf.mxu0
  %v515 = vadd.f32 %v92, %v514
  %v516 = vpop.f32.mrf.mxu0
  %v517 = vadd.f32 %v88, %v516
  %v518 = vpop.f32.mrf.mxu0
  %v519 = vadd.f32 %v92, %v518
  %520 = vmatprep.mubr.bf16.mxu0 0
  %521 = vmatmul.mubr.bf16.gmra.mxu0 %v136
  %v522 = vpop.f32.mrf.mxu0
  %v523 = vadd.f32 %v88, %v522
  %v524 = vpop.f32.mrf.mxu0
  %v525 = vadd.f32 %v92, %v524
  %v526 = vpop.f32.mrf.mxu0
  %v527 = vadd.f32 %v88, %v526
  %v528 = vpop.f32.mrf.mxu0
  %v529 = vadd.f32 %v92, %v528
  %530 = vdwg.mxu0
  %v531 = vmax.f32 %v340, 0.0
  %v532 = vmax.f32 %v342, 0.0
  %v533 = vmax.f32 %v453, 0.0
  %v534 = vmax.f32 %v455, 0.0
  %v535 = vmax.f32 %v344, 0.0
  %v536 = vmax.f32 %v346, 0.0
  %v537 = vmax.f32 %v457, 0.0
  %v538 = vmax.f32 %v459, 0.0
  %v539 = vmax.f32 %v350, 0.0
  %v540 = vmax.f32 %v352, 0.0
  %v541 = vmax.f32 %v463, 0.0
  %v542 = vmax.f32 %v465, 0.0
  %v543 = vmax.f32 %v354, 0.0
  %v544 = vmax.f32 %v356, 0.0
  %v545 = vmax.f32 %v467, 0.0
  %v546 = vmax.f32 %v469, 0.0
  %v547 = vmax.f32 %v360, 0.0
  %v548 = vmax.f32 %v362, 0.0
  %v549 = vmax.f32 %v473, 0.0
  %v550 = vmax.f32 %v475, 0.0
  %v551 = vmax.f32 %v364, 0.0
  %v552 = vmax.f32 %v366, 0.0
  %v553 = vmax.f32 %v477, 0.0
  %v554 = vmax.f32 %v479, 0.0
  %v555 = vmax.f32 %v370, 0.0
  %v556 = vmax.f32 %v372, 0.0
  %v557 = vmax.f32 %v483, 0.0
  %v558 = vmax.f32 %v485, 0.0
  %v559 = vmax.f32 %v374, 0.0
  %v560 = vmax.f32 %v376, 0.0
  %v561 = vmax.f32 %v487, 0.0
  %v562 = vmax.f32 %v489, 0.0
  %v563 = vmax.f32 %v380, 0.0
  %v564 = vmax.f32 %v382, 0.0
  %v565 = vmax.f32 %v493, 0.0
  %v566 = vmax.f32 %v495, 0.0
  %v567 = vmax.f32 %v384, 0.0
  %v568 = vmax.f32 %v386, 0.0
  %v569 = vmax.f32 %v497, 0.0
  %v570 = vmax.f32 %v499, 0.0
  %v571 = vmax.f32 %v390, 0.0
  %v572 = vmax.f32 %v392, 0.0
  %v573 = vmax.f32 %v503, 0.0
  %v574 = vmax.f32 %v505, 0.0
  %v575 = vmax.f32 %v394, 0.0
  %v576 = vmax.f32 %v396, 0.0
  %v577 = vmax.f32 %v507, 0.0
  %v578 = vmax.f32 %v509, 0.0
  %v579 = vmax.f32 %v400, 0.0
  %v580 = vmax.f32 %v402, 0.0
  %v581 = vmax.f32 %v513, 0.0
  %v582 = vmax.f32 %v515, 0.0
  %v583 = vmax.f32 %v404, 0.0
  %v584 = vmax.f32 %v406, 0.0
  %v585 = vmax.f32 %v517, 0.0
  %v586 = vmax.f32 %v519, 0.0
  %v587 = vmax.f32 %v410, 0.0
  %v588 = vmax.f32 %v412, 0.0
  %v589 = vmax.f32 %v523, 0.0
  %v590 = vmax.f32 %v525, 0.0
  %v591 = vmax.f32 %v414, 0.0
  %v592 = vmax.f32 %v416, 0.0
  %v593 = vmax.f32 %v527, 0.0
  %v594 = vmax.f32 %v529, 0.0
  %v595 = vpack.c.bf16 %v535, %v531
  %v596 = vpack.c.bf16 %v536, %v532
  %v597 = vpack.c.bf16 %v537, %v533
  %v598 = vpack.c.bf16 %v538, %v534
  %v599 = vpack.c.bf16 %v543, %v539
  %v600 = vpack.c.bf16 %v544, %v540
  %v601 = vpack.c.bf16 %v545, %v541
  %v602 = vpack.c.bf16 %v546, %v542
  %v603 = vpack.c.bf16 %v551, %v547
  %v604 = vpack.c.bf16 %v552, %v548
  %v605 = vpack.c.bf16 %v553, %v549
  %v606 = vpack.c.bf16 %v554, %v550
  %v607 = vpack.c.bf16 %v559, %v555
  %v608 = vpack.c.bf16 %v560, %v556
  %v609 = vpack.c.bf16 %v561, %v557
  %v610 = vpack.c.bf16 %v562, %v558
  %v611 = vpack.c.bf16 %v567, %v563
  %v612 = vpack.c.bf16 %v568, %v564
  %v613 = vpack.c.bf16 %v569, %v565
  %v614 = vpack.c.bf16 %v570, %v566
  %v615 = vpack.c.bf16 %v575, %v571
  %v616 = vpack.c.bf16 %v576, %v572
  %v617 = vpack.c.bf16 %v577, %v573
  %v618 = vpack.c.bf16 %v578, %v574
  %v619 = vpack.c.bf16 %v583, %v579
  %v620 = vpack.c.bf16 %v584, %v580
  %v621 = vpack.c.bf16 %v585, %v581
  %v622 = vpack.c.bf16 %v586, %v582
  %v623 = vpack.c.bf16 %v591, %v587
  %v624 = vpack.c.bf16 %v592, %v588
  %v625 = vpack.c.bf16 %v593, %v589
  %v626 = vpack.c.bf16 %v594, %v590
  %v627 = vld [vmem:[%s3] sm:$0xff]
  %v628 = vld [vmem:[%s3 + $0x8] sm:$0xff]
  %v629 = vld [vmem:[%s3 + $0x10] sm:$0xff]
  %v630 = vld [vmem:[%s3 + $0x18] sm:$0xff]
  %v631 = vld [vmem:[%s3 + $0x20] sm:$0xff]
  %v632 = vld [vmem:[%s3 + $0x28] sm:$0xff]
  %v633 = vld [vmem:[%s3 + $0x30] sm:$0xff]
  %v634 = vld [vmem:[%s3 + $0x38] sm:$0xff]
  %v635 = vld [vmem:[%s3 + $0x40] sm:$0xff]
  %v636 = vld [vmem:[%s3 + $0x48] sm:$0xff]
  %v637 = vld [vmem:[%s3 + $0x50] sm:$0xff]
  %v638 = vld [vmem:[%s3 + $0x58] sm:$0xff]
  %v639 = vld [vmem:[%s3 + $0x60] sm:$0xff]
  %v640 = vld [vmem:[%s3 + $0x68] sm:$0xff]
  %v641 = vld [vmem:[%s3 + $0x70] sm:$0xff]
  %v642 = vld [vmem:[%s3 + $0x78] sm:$0xff]
  %v643 = vld [vmem:[%s3 + $0x80] sm:$0xff]
  %v644 = vld [vmem:[%s3 + $0x88] sm:$0xff]
  %v645 = vld [vmem:[%s3 + $0x90] sm:$0xff]
  %v646 = vld [vmem:[%s3 + $0x98] sm:$0xff]
  %v647 = vld [vmem:[%s3 + $0xa0] sm:$0xff]
  %v648 = vld [vmem:[%s3 + $0xa8] sm:$0xff]
  %v649 = vld [vmem:[%s3 + $0xb0] sm:$0xff]
  %v650 = vld [vmem:[%s3 + $0xb8] sm:$0xff]
  %v651 = vld [vmem:[%s3 + $0xc0] sm:$0xff]
  %v652 = vld [vmem:[%s3 + $0xc8] sm:$0xff]
  %v653 = vld [vmem:[%s3 + $0xd0] sm:$0xff]
  %v654 = vld [vmem:[%s3 + $0xd8] sm:$0xff]
  %v655 = vld [vmem:[%s3 + $0xe0] sm:$0xff]
  %v656 = vld [vmem:[%s3 + $0xe8] sm:$0xff]
  %v657 = vld [vmem:[%s3 + $0xf0] sm:$0xff]
  %v658 = vld [vmem:[%s3 + $0xf8] sm:$0xff]
  %v659 = vld [vmem:[%s3 + $0x100] sm:$0xff]
  %v660 = vld [vmem:[%s3 + $0x108] sm:$0xff]
  %v661 = vld [vmem:[%s3 + $0x110] sm:$0xff]
  %v662 = vld [vmem:[%s3 + $0x118] sm:$0xff]
  %v663 = vld [vmem:[%s3 + $0x120] sm:$0xff]
  %v664 = vld [vmem:[%s3 + $0x128] sm:$0xff]
  %v665 = vld [vmem:[%s3 + $0x130] sm:$0xff]
  %v666 = vld [vmem:[%s3 + $0x138] sm:$0xff]
  %v667 = vld [vmem:[%s3 + $0x140] sm:$0xff]
  %v668 = vld [vmem:[%s3 + $0x148] sm:$0xff]
  %v669 = vld [vmem:[%s3 + $0x150] sm:$0xff]
  %v670 = vld [vmem:[%s3 + $0x158] sm:$0xff]
  %v671 = vld [vmem:[%s3 + $0x160] sm:$0xff]
  %v672 = vld [vmem:[%s3 + $0x168] sm:$0xff]
  %v673 = vld [vmem:[%s3 + $0x170] sm:$0xff]
  %v674 = vld [vmem:[%s3 + $0x178] sm:$0xff]
  %v675 = vld [vmem:[%s3 + $0x180] sm:$0xff]
  %v676 = vld [vmem:[%s3 + $0x188] sm:$0xff]
  %v677 = vld [vmem:[%s3 + $0x190] sm:$0xff]
  %v678 = vld [vmem:[%s3 + $0x198] sm:$0xff]
  %v679 = vld [vmem:[%s3 + $0x1a0] sm:$0xff]
  %v680 = vld [vmem:[%s3 + $0x1a8] sm:$0xff]
  %v681 = vld [vmem:[%s3 + $0x1b0] sm:$0xff]
  %v682 = vld [vmem:[%s3 + $0x1b8] sm:$0xff]
  %v683 = vld [vmem:[%s3 + $0x1c0] sm:$0xff]
  %v684 = vld [vmem:[%s3 + $0x1c8] sm:$0xff]
  %v685 = vld [vmem:[%s3 + $0x1d0] sm:$0xff]
  %v686 = vld [vmem:[%s3 + $0x1d8] sm:$0xff]
  %v687 = vld [vmem:[%s3 + $0x1e0] sm:$0xff]
  %v688 = vld [vmem:[%s3 + $0x1e8] sm:$0xff]
  %v689 = vld [vmem:[%s3 + $0x1f0] sm:$0xff]
  %v690 = vld [vmem:[%s3 + $0x1f8] sm:$0xff]
  %v691 = vld [vmem:[%s3 + $0x200] sm:$0xff]
  %v692 = vld [vmem:[%s3 + $0x208] sm:$0xff]
  %v693 = vld [vmem:[%s3 + $0x210] sm:$0xff]
  %v694 = vld [vmem:[%s3 + $0x218] sm:$0xff]
  %v695 = vld [vmem:[%s3 + $0x220] sm:$0xff]
  %v696 = vld [vmem:[%s3 + $0x228] sm:$0xff]
  %v697 = vld [vmem:[%s3 + $0x230] sm:$0xff]
  %v698 = vld [vmem:[%s3 + $0x238] sm:$0xff]
  %v699 = vld [vmem:[%s3 + $0x240] sm:$0xff]
  %v700 = vld [vmem:[%s3 + $0x248] sm:$0xff]
  %v701 = vld [vmem:[%s3 + $0x250] sm:$0xff]
  %v702 = vld [vmem:[%s3 + $0x258] sm:$0xff]
  %v703 = vld [vmem:[%s3 + $0x260] sm:$0xff]
  %v704 = vld [vmem:[%s3 + $0x268] sm:$0xff]
  %v705 = vld [vmem:[%s3 + $0x270] sm:$0xff]
  %v706 = vld [vmem:[%s3 + $0x278] sm:$0xff]
  %v707 = vld [vmem:[%s3 + $0x280] sm:$0xff]
  %v708 = vld [vmem:[%s3 + $0x288] sm:$0xff]
  %v709 = vld [vmem:[%s3 + $0x290] sm:$0xff]
  %v710 = vld [vmem:[%s3 + $0x298] sm:$0xff]
  %v711 = vld [vmem:[%s3 + $0x2a0] sm:$0xff]
  %v712 = vld [vmem:[%s3 + $0x2a8] sm:$0xff]
  %v713 = vld [vmem:[%s3 + $0x2b0] sm:$0xff]
  %v714 = vld [vmem:[%s3 + $0x2b8] sm:$0xff]
  %v715 = vld [vmem:[%s3 + $0x2c0] sm:$0xff]
  %v716 = vld [vmem:[%s3 + $0x2c8] sm:$0xff]
  %v717 = vld [vmem:[%s3 + $0x2d0] sm:$0xff]
  %v718 = vld [vmem:[%s3 + $0x2d8] sm:$0xff]
  %v719 = vld [vmem:[%s3 + $0x2e0] sm:$0xff]
  %v720 = vld [vmem:[%s3 + $0x2e8] sm:$0xff]
  %v721 = vld [vmem:[%s3 + $0x2f0] sm:$0xff]
  %v722 = vld [vmem:[%s3 + $0x2f8] sm:$0xff]
  %v723 = vld [vmem:[%s3 + $0x300] sm:$0xff]
  %v724 = vld [vmem:[%s3 + $0x308] sm:$0xff]
  %v725 = vld [vmem:[%s3 + $0x310] sm:$0xff]
  %v726 = vld [vmem:[%s3 + $0x318] sm:$0xff]
  %v727 = vld [vmem:[%s3 + $0x320] sm:$0xff]
  %v728 = vld [vmem:[%s3 + $0x328] sm:$0xff]
  %v729 = vld [vmem:[%s3 + $0x330] sm:$0xff]
  %v730 = vld [vmem:[%s3 + $0x338] sm:$0xff]
  %v731 = vld [vmem:[%s3 + $0x340] sm:$0xff]
  %v732 = vld [vmem:[%s3 + $0x348] sm:$0xff]
  %v733 = vld [vmem:[%s3 + $0x350] sm:$0xff]
  %v734 = vld [vmem:[%s3 + $0x358] sm:$0xff]
  %v735 = vld [vmem:[%s3 + $0x360] sm:$0xff]
  %v736 = vld [vmem:[%s3 + $0x368] sm:$0xff]
  %v737 = vld [vmem:[%s3 + $0x370] sm:$0xff]
  %v738 = vld [vmem:[%s3 + $0x378] sm:$0xff]
  %v739 = vld [vmem:[%s3 + $0x380] sm:$0xff]
  %v740 = vld [vmem:[%s3 + $0x388] sm:$0xff]
  %v741 = vld [vmem:[%s3 + $0x390] sm:$0xff]
  %v742 = vld [vmem:[%s3 + $0x398] sm:$0xff]
  %v743 = vld [vmem:[%s3 + $0x3a0] sm:$0xff]
  %v744 = vld [vmem:[%s3 + $0x3a8] sm:$0xff]
  %v745 = vld [vmem:[%s3 + $0x3b0] sm:$0xff]
  %v746 = vld [vmem:[%s3 + $0x3b8] sm:$0xff]
  %v747 = vld [vmem:[%s3 + $0x3c0] sm:$0xff]
  %v748 = vld [vmem:[%s3 + $0x3c8] sm:$0xff]
  %v749 = vld [vmem:[%s3 + $0x3d0] sm:$0xff]
  %v750 = vld [vmem:[%s3 + $0x3d8] sm:$0xff]
  %v751 = vld [vmem:[%s3 + $0x3e0] sm:$0xff]
  %v752 = vld [vmem:[%s3 + $0x3e8] sm:$0xff]
  %v753 = vld [vmem:[%s3 + $0x3f0] sm:$0xff]
  %v754 = vld [vmem:[%s3 + $0x3f8] sm:$0xff]
  %v755 = vld [vmem:[%s4] sm:$0xf]
  %v757 = vlaneseq
  %v758 = vshrl.u32 %v757, 7
  %v759 = vsub.s32 0, %v758
  %v760 = vrot.slane %v755, %v759
  %v761 = vlaneseq
  %v762 = vshrl.u32 %v761, 7
  %v763 = vsub.s32 1, %v762
  %v764 = vrot.slane %v755, %v763
  %v765 = vlaneseq
  %v766 = vshrl.u32 %v765, 7
  %v767 = vsub.s32 2, %v766
  %v768 = vrot.slane %v755, %v767
  %v769 = vlaneseq
  %v770 = vshrl.u32 %v769, 7
  %v771 = vsub.s32 3, %v770
  %v772 = vrot.slane %v755, %v771
  %v905 = vunpack.c.l.b16 %v627
  %v906 = vunpack.c.h.b16 %v627
  %v907 = vunpack.c.l.b16 %v628
  %v908 = vunpack.c.h.b16 %v628
  %v909 = vunpack.c.l.b16 %v629
  %v910 = vunpack.c.h.b16 %v629
  %v911 = vunpack.c.l.b16 %v630
  %v912 = vunpack.c.h.b16 %v630
  %v913 = vunpack.c.l.b16 %v631
  %v914 = vunpack.c.h.b16 %v631
  %v915 = vunpack.c.l.b16 %v632
  %v916 = vunpack.c.h.b16 %v632
  %v917 = vunpack.c.l.b16 %v633
  %v918 = vunpack.c.h.b16 %v633
  %v919 = vunpack.c.l.b16 %v634
  %v920 = vunpack.c.h.b16 %v634
  %v921 = vunpack.c.l.b16 %v635
  %v922 = vunpack.c.h.b16 %v635
  %v923 = vunpack.c.l.b16 %v636
  %v924 = vunpack.c.h.b16 %v636
  %v925 = vunpack.c.l.b16 %v637
  %v926 = vunpack.c.h.b16 %v637
  %v927 = vunpack.c.l.b16 %v638
  %v928 = vunpack.c.h.b16 %v638
  %v929 = vunpack.c.l.b16 %v639
  %v930 = vunpack.c.h.b16 %v639
  %v931 = vunpack.c.l.b16 %v640
  %v932 = vunpack.c.h.b16 %v640
  %v933 = vunpack.c.l.b16 %v641
  %v934 = vunpack.c.h.b16 %v641
  %v935 = vunpack.c.l.b16 %v642
  %v936 = vunpack.c.h.b16 %v642
  %v937 = vunpack.c.l.b16 %v643
  %v938 = vunpack.c.h.b16 %v643
  %v939 = vunpack.c.l.b16 %v644
  %v940 = vunpack.c.h.b16 %v644
  %v941 = vunpack.c.l.b16 %v645
  %v942 = vunpack.c.h.b16 %v645
  %v943 = vunpack.c.l.b16 %v646
  %v944 = vunpack.c.h.b16 %v646
  %v945 = vunpack.c.l.b16 %v647
  %v946 = vunpack.c.h.b16 %v647
  %v947 = vunpack.c.l.b16 %v648
  %v948 = vunpack.c.h.b16 %v648
  %v949 = vunpack.c.l.b16 %v649
  %v950 = vunpack.c.h.b16 %v649
  %v951 = vunpack.c.l.b16 %v650
  %v952 = vunpack.c.h.b16 %v650
  %v953 = vunpack.c.l.b16 %v651
  %v954 = vunpack.c.h.b16 %v651
  %v955 = vunpack.c.l.b16 %v652
  %v956 = vunpack.c.h.b16 %v652
  %v957 = vunpack.c.l.b16 %v653
  %v958 = vunpack.c.h.b16 %v653
  %v959 = vunpack.c.l.b16 %v654
  %v960 = vunpack.c.h.b16 %v654
  %v961 = vunpack.c.l.b16 %v655
  %v962 = vunpack.c.h.b16 %v655
  %v963 = vunpack.c.l.b16 %v656
  %v964 = vunpack.c.h.b16 %v656
  %v965 = vunpack.c.l.b16 %v657
  %v966 = vunpack.c.h.b16 %v657
  %v967 = vunpack.c.l.b16 %v658
  %v968 = vunpack.c.h.b16 %v658
  %v969 = vunpack.c.l.b16 %v659
  %v970 = vunpack.c.h.b16 %v659
  %v971 = vunpack.c.l.b16 %v660
  %v972 = vunpack.c.h.b16 %v660
  %v973 = vunpack.c.l.b16 %v661
  %v974 = vunpack.c.h.b16 %v661
  %v975 = vunpack.c.l.b16 %v662
  %v976 = vunpack.c.h.b16 %v662
  %v977 = vunpack.c.l.b16 %v663
  %v978 = vunpack.c.h.b16 %v663
  %v979 = vunpack.c.l.b16 %v664
  %v980 = vunpack.c.h.b16 %v664
  %v981 = vunpack.c.l.b16 %v665
  %v982 = vunpack.c.h.b16 %v665
  %v983 = vunpack.c.l.b16 %v666
  %v984 = vunpack.c.h.b16 %v666
  %v985 = vunpack.c.l.b16 %v667
  %v986 = vunpack.c.h.b16 %v667
  %v987 = vunpack.c.l.b16 %v668
  %v988 = vunpack.c.h.b16 %v668
  %v989 = vunpack.c.l.b16 %v669
  %v990 = vunpack.c.h.b16 %v669
  %v991 = vunpack.c.l.b16 %v670
  %v992 = vunpack.c.h.b16 %v670
  %v993 = vunpack.c.l.b16 %v671
  %v994 = vunpack.c.h.b16 %v671
  %v995 = vunpack.c.l.b16 %v672
  %v996 = vunpack.c.h.b16 %v672
  %v997 = vunpack.c.l.b16 %v673
  %v998 = vunpack.c.h.b16 %v673
  %v999 = vunpack.c.l.b16 %v674
  %v1000 = vunpack.c.h.b16 %v674
  %v1001 = vunpack.c.l.b16 %v675
  %v1002 = vunpack.c.h.b16 %v675
  %v1003 = vunpack.c.l.b16 %v676
  %v1004 = vunpack.c.h.b16 %v676
  %v1005 = vunpack.c.l.b16 %v677
  %v1006 = vunpack.c.h.b16 %v677
  %v1007 = vunpack.c.l.b16 %v678
  %v1008 = vunpack.c.h.b16 %v678
  %v1009 = vunpack.c.l.b16 %v679
  %v1010 = vunpack.c.h.b16 %v679
  %v1011 = vunpack.c.l.b16 %v680
  %v1012 = vunpack.c.h.b16 %v680
  %v1013 = vunpack.c.l.b16 %v681
  %v1014 = vunpack.c.h.b16 %v681
  %v1015 = vunpack.c.l.b16 %v682
  %v1016 = vunpack.c.h.b16 %v682
  %v1017 = vunpack.c.l.b16 %v683
  %v1018 = vunpack.c.h.b16 %v683
  %v1019 = vunpack.c.l.b16 %v684
  %v1020 = vunpack.c.h.b16 %v684
  %v1021 = vunpack.c.l.b16 %v685
  %v1022 = vunpack.c.h.b16 %v685
  %v1023 = vunpack.c.l.b16 %v686
  %v1024 = vunpack.c.h.b16 %v686
  %v1025 = vunpack.c.l.b16 %v687
  %v1026 = vunpack.c.h.b16 %v687
  %v1027 = vunpack.c.l.b16 %v688
  %v1028 = vunpack.c.h.b16 %v688
  %v1029 = vunpack.c.l.b16 %v689
  %v1030 = vunpack.c.h.b16 %v689
  %v1031 = vunpack.c.l.b16 %v690
  %v1032 = vunpack.c.h.b16 %v690
  %v1033 = vunpack.c.l.b16 %v691
  %v1034 = vunpack.c.h.b16 %v691
  %v1035 = vunpack.c.l.b16 %v692
  %v1036 = vunpack.c.h.b16 %v692
  %v1037 = vunpack.c.l.b16 %v693
  %v1038 = vunpack.c.h.b16 %v693
  %v1039 = vunpack.c.l.b16 %v694
  %v1040 = vunpack.c.h.b16 %v694
  %v1041 = vunpack.c.l.b16 %v695
  %v1042 = vunpack.c.h.b16 %v695
  %v1043 = vunpack.c.l.b16 %v696
  %v1044 = vunpack.c.h.b16 %v696
  %v1045 = vunpack.c.l.b16 %v697
  %v1046 = vunpack.c.h.b16 %v697
  %v1047 = vunpack.c.l.b16 %v698
  %v1048 = vunpack.c.h.b16 %v698
  %v1049 = vunpack.c.l.b16 %v699
  %v1050 = vunpack.c.h.b16 %v699
  %v1051 = vunpack.c.l.b16 %v700
  %v1052 = vunpack.c.h.b16 %v700
  %v1053 = vunpack.c.l.b16 %v701
  %v1054 = vunpack.c.h.b16 %v701
  %v1055 = vunpack.c.l.b16 %v702
  %v1056 = vunpack.c.h.b16 %v702
  %v1057 = vunpack.c.l.b16 %v703
  %v1058 = vunpack.c.h.b16 %v703
  %v1059 = vunpack.c.l.b16 %v704
  %v1060 = vunpack.c.h.b16 %v704
  %v1061 = vunpack.c.l.b16 %v705
  %v1062 = vunpack.c.h.b16 %v705
  %v1063 = vunpack.c.l.b16 %v706
  %v1064 = vunpack.c.h.b16 %v706
  %v1065 = vunpack.c.l.b16 %v707
  %v1066 = vunpack.c.h.b16 %v707
  %v1067 = vunpack.c.l.b16 %v708
  %v1068 = vunpack.c.h.b16 %v708
  %v1069 = vunpack.c.l.b16 %v709
  %v1070 = vunpack.c.h.b16 %v709
  %v1071 = vunpack.c.l.b16 %v710
  %v1072 = vunpack.c.h.b16 %v710
  %v1073 = vunpack.c.l.b16 %v711
  %v1074 = vunpack.c.h.b16 %v711
  %v1075 = vunpack.c.l.b16 %v712
  %v1076 = vunpack.c.h.b16 %v712
  %v1077 = vunpack.c.l.b16 %v713
  %v1078 = vunpack.c.h.b16 %v713
  %v1079 = vunpack.c.l.b16 %v714
  %v1080 = vunpack.c.h.b16 %v714
  %v1081 = vunpack.c.l.b16 %v715
  %v1082 = vunpack.c.h.b16 %v715
  %v1083 = vunpack.c.l.b16 %v716
  %v1084 = vunpack.c.h.b16 %v716
  %v1085 = vunpack.c.l.b16 %v717
  %v1086 = vunpack.c.h.b16 %v717
  %v1087 = vunpack.c.l.b16 %v718
  %v1088 = vunpack.c.h.b16 %v718
  %v1089 = vunpack.c.l.b16 %v719
  %v1090 = vunpack.c.h.b16 %v719
  %v1091 = vunpack.c.l.b16 %v720
  %v1092 = vunpack.c.h.b16 %v720
  %v1093 = vunpack.c.l.b16 %v721
  %v1094 = vunpack.c.h.b16 %v721
  %v1095 = vunpack.c.l.b16 %v722
  %v1096 = vunpack.c.h.b16 %v722
  %v1097 = vunpack.c.l.b16 %v723
  %v1098 = vunpack.c.h.b16 %v723
  %v1099 = vunpack.c.l.b16 %v724
  %v1100 = vunpack.c.h.b16 %v724
  %v1101 = vunpack.c.l.b16 %v725
  %v1102 = vunpack.c.h.b16 %v725
  %v1103 = vunpack.c.l.b16 %v726
  %v1104 = vunpack.c.h.b16 %v726
  %v1105 = vunpack.c.l.b16 %v727
  %v1106 = vunpack.c.h.b16 %v727
  %v1107 = vunpack.c.l.b16 %v728
  %v1108 = vunpack.c.h.b16 %v728
  %v1109 = vunpack.c.l.b16 %v729
  %v1110 = vunpack.c.h.b16 %v729
  %v1111 = vunpack.c.l.b16 %v730
  %v1112 = vunpack.c.h.b16 %v730
  %v1113 = vunpack.c.l.b16 %v731
  %v1114 = vunpack.c.h.b16 %v731
  %v1115 = vunpack.c.l.b16 %v732
  %v1116 = vunpack.c.h.b16 %v732
  %v1117 = vunpack.c.l.b16 %v733
  %v1118 = vunpack.c.h.b16 %v733
  %v1119 = vunpack.c.l.b16 %v734
  %v1120 = vunpack.c.h.b16 %v734
  %v1121 = vunpack.c.l.b16 %v735
  %v1122 = vunpack.c.h.b16 %v735
  %v1123 = vunpack.c.l.b16 %v736
  %v1124 = vunpack.c.h.b16 %v736
  %v1125 = vunpack.c.l.b16 %v737
  %v1126 = vunpack.c.h.b16 %v737
  %v1127 = vunpack.c.l.b16 %v738
  %v1128 = vunpack.c.h.b16 %v738
  %v1129 = vunpack.c.l.b16 %v739
  %v1130 = vunpack.c.h.b16 %v739
  %v1131 = vunpack.c.l.b16 %v740
  %v1132 = vunpack.c.h.b16 %v740
  %v1133 = vunpack.c.l.b16 %v741
  %v1134 = vunpack.c.h.b16 %v741
  %v1135 = vunpack.c.l.b16 %v742
  %v1136 = vunpack.c.h.b16 %v742
  %v1137 = vunpack.c.l.b16 %v743
  %v1138 = vunpack.c.h.b16 %v743
  %v1139 = vunpack.c.l.b16 %v744
  %v1140 = vunpack.c.h.b16 %v744
  %v1141 = vunpack.c.l.b16 %v745
  %v1142 = vunpack.c.h.b16 %v745
  %v1143 = vunpack.c.l.b16 %v746
  %v1144 = vunpack.c.h.b16 %v746
  %v1145 = vunpack.c.l.b16 %v747
  %v1146 = vunpack.c.h.b16 %v747
  %v1147 = vunpack.c.l.b16 %v748
  %v1148 = vunpack.c.h.b16 %v748
  %v1149 = vunpack.c.l.b16 %v749
  %v1150 = vunpack.c.h.b16 %v749
  %v1151 = vunpack.c.l.b16 %v750
  %v1152 = vunpack.c.h.b16 %v750
  %v1153 = vunpack.c.l.b16 %v751
  %v1154 = vunpack.c.h.b16 %v751
  %v1155 = vunpack.c.l.b16 %v752
  %v1156 = vunpack.c.h.b16 %v752
  %v1157 = vunpack.c.l.b16 %v753
  %v1158 = vunpack.c.h.b16 %v753
  %v1159 = vunpack.c.l.b16 %v754
  %v1160 = vunpack.c.h.b16 %v754
  %v1161 = vpack.c.b16 %v909, %v905
  %v1162 = vpack.c.b16 %v910, %v906
  %v1163 = vpack.c.b16 %v911, %v907
  %v1164 = vpack.c.b16 %v912, %v908
  %v1165 = vpack.c.b16 %v917, %v913
  %v1166 = vpack.c.b16 %v918, %v914
  %v1167 = vpack.c.b16 %v919, %v915
  %v1168 = vpack.c.b16 %v920, %v916
  %v1169 = vpack.c.b16 %v925, %v921
  %v1170 = vpack.c.b16 %v926, %v922
  %v1171 = vpack.c.b16 %v927, %v923
  %v1172 = vpack.c.b16 %v928, %v924
  %v1173 = vpack.c.b16 %v933, %v929
  %v1174 = vpack.c.b16 %v934, %v930
  %v1175 = vpack.c.b16 %v935, %v931
  %v1176 = vpack.c.b16 %v936, %v932
  %v1177 = vpack.c.b16 %v941, %v937
  %v1178 = vpack.c.b16 %v942, %v938
  %v1179 = vpack.c.b16 %v943, %v939
  %v1180 = vpack.c.b16 %v944, %v940
  %v1181 = vpack.c.b16 %v949, %v945
  %v1182 = vpack.c.b16 %v950, %v946
  %v1183 = vpack.c.b16 %v951, %v947
  %v1184 = vpack.c.b16 %v952, %v948
  %v1185 = vpack.c.b16 %v957, %v953
  %v1186 = vpack.c.b16 %v958, %v954
  %v1187 = vpack.c.b16 %v959, %v955
  %v1188 = vpack.c.b16 %v960, %v956
  %v1189 = vpack.c.b16 %v965, %v961
  %v1190 = vpack.c.b16 %v966, %v962
  %v1191 = vpack.c.b16 %v967, %v963
  %v1192 = vpack.c.b16 %v968, %v964
  %v1193 = vpack.c.b16 %v973, %v969
  %v1194 = vpack.c.b16 %v974, %v970
  %v1195 = vpack.c.b16 %v975, %v971
  %v1196 = vpack.c.b16 %v976, %v972
  %v1197 = vpack.c.b16 %v981, %v977
  %v1198 = vpack.c.b16 %v982, %v978
  %v1199 = vpack.c.b16 %v983, %v979
  %v1200 = vpack.c.b16 %v984, %v980
  %v1201 = vpack.c.b16 %v989, %v985
  %v1202 = vpack.c.b16 %v990, %v986
  %v1203 = vpack.c.b16 %v991, %v987
  %v1204 = vpack.c.b16 %v992, %v988
  %v1205 = vpack.c.b16 %v997, %v993
  %v1206 = vpack.c.b16 %v998, %v994
  %v1207 = vpack.c.b16 %v999, %v995
  %v1208 = vpack.c.b16 %v1000, %v996
  %v1209 = vpack.c.b16 %v1005, %v1001
  %v1210 = vpack.c.b16 %v1006, %v1002
  %v1211 = vpack.c.b16 %v1007, %v1003
  %v1212 = vpack.c.b16 %v1008, %v1004
  %v1213 = vpack.c.b16 %v1013, %v1009
  %v1214 = vpack.c.b16 %v1014, %v1010
  %v1215 = vpack.c.b16 %v1015, %v1011
  %v1216 = vpack.c.b16 %v1016, %v1012
  %v1217 = vpack.c.b16 %v1021, %v1017
  %v1218 = vpack.c.b16 %v1022, %v1018
  %v1219 = vpack.c.b16 %v1023, %v1019
  %v1220 = vpack.c.b16 %v1024, %v1020
  %v1221 = vpack.c.b16 %v1029, %v1025
  %v1222 = vpack.c.b16 %v1030, %v1026
  %v1223 = vpack.c.b16 %v1031, %v1027
  %v1224 = vpack.c.b16 %v1032, %v1028
  %v1225 = vpack.c.b16 %v1037, %v1033
  %v1226 = vpack.c.b16 %v1038, %v1034
  %v1227 = vpack.c.b16 %v1039, %v1035
  %v1228 = vpack.c.b16 %v1040, %v1036
  %v1229 = vpack.c.b16 %v1045, %v1041
  %v1230 = vpack.c.b16 %v1046, %v1042
  %v1231 = vpack.c.b16 %v1047, %v1043
  %v1232 = vpack.c.b16 %v1048, %v1044
  %v1233 = vpack.c.b16 %v1053, %v1049
  %v1234 = vpack.c.b16 %v1054, %v1050
  %v1235 = vpack.c.b16 %v1055, %v1051
  %v1236 = vpack.c.b16 %v1056, %v1052
  %v1237 = vpack.c.b16 %v1061, %v1057
  %v1238 = vpack.c.b16 %v1062, %v1058
  %v1239 = vpack.c.b16 %v1063, %v1059
  %v1240 = vpack.c.b16 %v1064, %v1060
  %v1241 = vpack.c.b16 %v1069, %v1065
  %v1242 = vpack.c.b16 %v1070, %v1066
  %v1243 = vpack.c.b16 %v1071, %v1067
  %v1244 = vpack.c.b16 %v1072, %v1068
  %v1245 = vpack.c.b16 %v1077, %v1073
  %v1246 = vpack.c.b16 %v1078, %v1074
  %v1247 = vpack.c.b16 %v1079, %v1075
  %v1248 = vpack.c.b16 %v1080, %v1076
  %v1249 = vpack.c.b16 %v1085, %v1081
  %v1250 = vpack.c.b16 %v1086, %v1082
  %v1251 = vpack.c.b16 %v1087, %v1083
  %v1252 = vpack.c.b16 %v1088, %v1084
  %v1253 = vpack.c.b16 %v1093, %v1089
  %v1254 = vpack.c.b16 %v1094, %v1090
  %v1255 = vpack.c.b16 %v1095, %v1091
  %v1256 = vpack.c.b16 %v1096, %v1092
  %v1257 = vpack.c.b16 %v1101, %v1097
  %v1258 = vpack.c.b16 %v1102, %v1098
  %v1259 = vpack.c.b16 %v1103, %v1099
  %v1260 = vpack.c.b16 %v1104, %v1100
  %v1261 = vpack.c.b16 %v1109, %v1105
  %v1262 = vpack.c.b16 %v1110, %v1106
  %v1263 = vpack.c.b16 %v1111, %v1107
  %v1264 = vpack.c.b16 %v1112, %v1108
  %v1265 = vpack.c.b16 %v1117, %v1113
  %v1266 = vpack.c.b16 %v1118, %v1114
  %v1267 = vpack.c.b16 %v1119, %v1115
  %v1268 = vpack.c.b16 %v1120, %v1116
  %v1269 = vpack.c.b16 %v1125, %v1121
  %v1270 = vpack.c.b16 %v1126, %v1122
  %v1271 = vpack.c.b16 %v1127, %v1123
  %v1272 = vpack.c.b16 %v1128, %v1124
  %v1273 = vpack.c.b16 %v1133, %v1129
  %v1274 = vpack.c.b16 %v1134, %v1130
  %v1275 = vpack.c.b16 %v1135, %v1131
  %v1276 = vpack.c.b16 %v1136, %v1132
  %v1277 = vpack.c.b16 %v1141, %v1137
  %v1278 = vpack.c.b16 %v1142, %v1138
  %v1279 = vpack.c.b16 %v1143, %v1139
  %v1280 = vpack.c.b16 %v1144, %v1140
  %v1281 = vpack.c.b16 %v1149, %v1145
  %v1282 = vpack.c.b16 %v1150, %v1146
  %v1283 = vpack.c.b16 %v1151, %v1147
  %v1284 = vpack.c.b16 %v1152, %v1148
  %v1285 = vpack.c.b16 %v1157, %v1153
  %v1286 = vpack.c.b16 %v1158, %v1154
  %v1287 = vpack.c.b16 %v1159, %v1155
  %v1288 = vpack.c.b16 %v1160, %v1156
  %1417 = vmatprep.subr.bf16.mxu0 %v1190
  %1418 = vmatpush1.bf16.msra.mxu0 %v1189
  %1419 = vmatprep.subr.bf16.mxu0 %v1186
  %1420 = vmatpush1.bf16.msra.mxu0 %v1185
  %1421 = vmatprep.subr.bf16.mxu0 %v1182
  %1422 = vmatpush1.bf16.msra.mxu0 %v1181
  %1423 = vmatprep.subr.bf16.mxu0 %v1178
  %1424 = vmatpush1.bf16.msra.mxu0 %v1177
  %1425 = vmatprep.subr.bf16.mxu0 %v1174
  %1426 = vmatpush1.bf16.msra.mxu0 %v1173
  %1427 = vmatprep.subr.bf16.mxu0 %v1170
  %1428 = vmatpush1.bf16.msra.mxu0 %v1169
  %1429 = vmatprep.subr.bf16.mxu0 %v1166
  %1430 = vmatpush1.bf16.msra.mxu0 %v1165
  %1431 = vmatprep.subr.bf16.mxu0 %v1162
  %1432 = vmatpush1.bf16.msra.mxu0 %v1161
  %1433 = vmatprep.subr.bf16.mxu0 %v1222
  %1434 = vmatpush2.bf16.msra.mxu0 %v1221
  %1435 = vmatprep.subr.bf16.mxu0 %v1218
  %1436 = vmatpush2.bf16.msra.mxu0 %v1217
  %1437 = vmatprep.subr.bf16.mxu0 %v1214
  %1438 = vmatpush2.bf16.msra.mxu0 %v1213
  %1439 = vmatprep.subr.bf16.mxu0 %v1210
  %1440 = vmatpush2.bf16.msra.mxu0 %v1209
  %1441 = vmatprep.subr.bf16.mxu0 %v1206
  %1442 = vmatpush2.bf16.msra.mxu0 %v1205
  %1443 = vmatprep.subr.bf16.mxu0 %v1202
  %1444 = vmatpush2.bf16.msra.mxu0 %v1201
  %1445 = vmatprep.subr.bf16.mxu0 %v1198
  %1446 = vmatpush2.bf16.msra.mxu0 %v1197
  %1447 = vmatprep.subr.bf16.mxu0 %v1194
  %1448 = vmatpush2.bf16.msra.mxu0 %v1193
  %1449 = vmatprep.mubr.bf16.mxu0 %v596
  %1450 = vmatmul.mubr.bf16.gmra.mxu0 %v595
  %v1451 = vpop.f32.mrf.mxu0
  %v1452 = vadd.f32 %v760, %v1451
  %v1453 = vpop.f32.mrf.mxu0
  %v1454 = vadd.f32 %v764, %v1453
  %v1455 = vpop.f32.mrf.mxu0
  %v1456 = vadd.f32 %v760, %v1455
  %v1457 = vpop.f32.mrf.mxu0
  %v1458 = vadd.f32 %v764, %v1457
  %1459 = vmatprep.mubr.bf16.mxu0 %v600
  %1460 = vmatmul.mubr.bf16.gmra.mxu0 %v599
  %v1461 = vpop.f32.mrf.mxu0
  %v1462 = vadd.f32 %v760, %v1461
  %v1463 = vpop.f32.mrf.mxu0
  %v1464 = vadd.f32 %v764, %v1463
  %v1465 = vpop.f32.mrf.mxu0
  %v1466 = vadd.f32 %v760, %v1465
  %v1467 = vpop.f32.mrf.mxu0
  %v1468 = vadd.f32 %v764, %v1467
  %1469 = vmatprep.mubr.bf16.mxu0 %v604
  %1470 = vmatmul.mubr.bf16.gmra.mxu0 %v603
  %v1471 = vpop.f32.mrf.mxu0
  %v1472 = vadd.f32 %v760, %v1471
  %v1473 = vpop.f32.mrf.mxu0
  %v1474 = vadd.f32 %v764, %v1473
  %v1475 = vpop.f32.mrf.mxu0
  %v1476 = vadd.f32 %v760, %v1475
  %v1477 = vpop.f32.mrf.mxu0
  %v1478 = vadd.f32 %v764, %v1477
  %1479 = vmatprep.mubr.bf16.mxu0 %v608
  %1480 = vmatmul.mubr.bf16.gmra.mxu0 %v607
  %v1481 = vpop.f32.mrf.mxu0
  %v1482 = vadd.f32 %v760, %v1481
  %v1483 = vpop.f32.mrf.mxu0
  %v1484 = vadd.f32 %v764, %v1483
  %v1485 = vpop.f32.mrf.mxu0
  %v1486 = vadd.f32 %v760, %v1485
  %v1487 = vpop.f32.mrf.mxu0
  %v1488 = vadd.f32 %v764, %v1487
  %1489 = vmatprep.mubr.bf16.mxu0 %v612
  %1490 = vmatmul.mubr.bf16.gmra.mxu0 %v611
  %v1491 = vpop.f32.mrf.mxu0
  %v1492 = vadd.f32 %v760, %v1491
  %v1493 = vpop.f32.mrf.mxu0
  %v1494 = vadd.f32 %v764, %v1493
  %v1495 = vpop.f32.mrf.mxu0
  %v1496 = vadd.f32 %v760, %v1495
  %v1497 = vpop.f32.mrf.mxu0
  %v1498 = vadd.f32 %v764, %v1497
  %1499 = vmatprep.mubr.bf16.mxu0 %v616
  %1500 = vmatmul.mubr.bf16.gmra.mxu0 %v615
  %v1501 = vpop.f32.mrf.mxu0
  %v1502 = vadd.f32 %v760, %v1501
  %v1503 = vpop.f32.mrf.mxu0
  %v1504 = vadd.f32 %v764, %v1503
  %v1505 = vpop.f32.mrf.mxu0
  %v1506 = vadd.f32 %v760, %v1505
  %v1507 = vpop.f32.mrf.mxu0
  %v1508 = vadd.f32 %v764, %v1507
  %1509 = vmatprep.mubr.bf16.mxu0 %v620
  %1510 = vmatmul.mubr.bf16.gmra.mxu0 %v619
  %v1511 = vpop.f32.mrf.mxu0
  %v1512 = vadd.f32 %v760, %v1511
  %v1513 = vpop.f32.mrf.mxu0
  %v1514 = vadd.f32 %v764, %v1513
  %v1515 = vpop.f32.mrf.mxu0
  %v1516 = vadd.f32 %v760, %v1515
  %v1517 = vpop.f32.mrf.mxu0
  %v1518 = vadd.f32 %v764, %v1517
  %1519 = vmatprep.mubr.bf16.mxu0 %v624
  %1520 = vmatmul.mubr.bf16.gmra.mxu0 %v623
  %v1521 = vpop.f32.mrf.mxu0
  %v1522 = vadd.f32 %v760, %v1521
  %v1523 = vpop.f32.mrf.mxu0
  %v1524 = vadd.f32 %v764, %v1523
  %v1525 = vpop.f32.mrf.mxu0
  %v1526 = vadd.f32 %v760, %v1525
  %v1527 = vpop.f32.mrf.mxu0
  %v1528 = vadd.f32 %v764, %v1527
  %1529 = vdwg.mxu0
  %1530 = vmatprep.subr.bf16.mxu0 %v1254
  %1531 = vmatpush1.bf16.msra.mxu0 %v1253
  %1532 = vmatprep.subr.bf16.mxu0 %v1250
  %1533 = vmatpush1.bf16.msra.mxu0 %v1249
  %1534 = vmatprep.subr.bf16.mxu0 %v1246
  %1535 = vmatpush1.bf16.msra.mxu0 %v1245
  %1536 = vmatprep.subr.bf16.mxu0 %v1242
  %1537 = vmatpush1.bf16.msra.mxu0 %v1241
  %1538 = vmatprep.subr.bf16.mxu0 %v1238
  %1539 = vmatpush1.bf16.msra.mxu0 %v1237
  %1540 = vmatprep.subr.bf16.mxu0 %v1234
  %1541 = vmatpush1.bf16.msra.mxu0 %v1233
  %1542 = vmatprep.subr.bf16.mxu0 %v1230
  %1543 = vmatpush1.bf16.msra.mxu0 %v1229
  %1544 = vmatprep.subr.bf16.mxu0 %v1226
  %1545 = vmatpush1.bf16.msra.mxu0 %v1225
  %1546 = vmatprep.subr.bf16.mxu0 %v1286
  %1547 = vmatpush2.bf16.msra.mxu0 %v1285
  %1548 = vmatprep.subr.bf16.mxu0 %v1282
  %1549 = vmatpush2.bf16.msra.mxu0 %v1281
  %1550 = vmatprep.subr.bf16.mxu0 %v1278
  %1551 = vmatpush2.bf16.msra.mxu0 %v1277
  %1552 = vmatprep.subr.bf16.mxu0 %v1274
  %1553 = vmatpush2.bf16.msra.mxu0 %v1273
  %1554 = vmatprep.subr.bf16.mxu0 %v1270
  %1555 = vmatpush2.bf16.msra.mxu0 %v1269
  %1556 = vmatprep.subr.bf16.mxu0 %v1266
  %1557 = vmatpush2.bf16.msra.mxu0 %v1265
  %1558 = vmatprep.subr.bf16.mxu0 %v1262
  %1559 = vmatpush2.bf16.msra.mxu0 %v1261
  %1560 = vmatprep.subr.bf16.mxu0 %v1258
  %1561 = vmatpush2.bf16.msra.mxu0 %v1257
  %1562 = vmatprep.mubr.bf16.mxu0 %v598
  %1563 = vmatmul.mubr.bf16.gmra.mxu0 %v597
  %v1564 = vpop.f32.mrf.mxu0
  %v1565 = vadd.f32 %v1452, %v1564
  %v1566 = vpop.f32.mrf.mxu0
  %v1567 = vadd.f32 %v1454, %v1566
  %v1568 = vpop.f32.mrf.mxu0
  %v1569 = vadd.f32 %v1456, %v1568
  %v1570 = vpop.f32.mrf.mxu0
  %v1571 = vadd.f32 %v1458, %v1570
  %1572 = vmatprep.mubr.bf16.mxu0 %v602
  %1573 = vmatmul.mubr.bf16.gmra.mxu0 %v601
  %v1574 = vpop.f32.mrf.mxu0
  %v1575 = vadd.f32 %v1462, %v1574
  %v1576 = vpop.f32.mrf.mxu0
  %v1577 = vadd.f32 %v1464, %v1576
  %v1578 = vpop.f32.mrf.mxu0
  %v1579 = vadd.f32 %v1466, %v1578
  %v1580 = vpop.f32.mrf.mxu0
  %v1581 = vadd.f32 %v1468, %v1580
  %1582 = vmatprep.mubr.bf16.mxu0 %v606
  %1583 = vmatmul.mubr.bf16.gmra.mxu0 %v605
  %v1584 = vpop.f32.mrf.mxu0
  %v1585 = vadd.f32 %v1472, %v1584
  %v1586 = vpop.f32.mrf.mxu0
  %v1587 = vadd.f32 %v1474, %v1586
  %v1588 = vpop.f32.mrf.mxu0
  %v1589 = vadd.f32 %v1476, %v1588
  %v1590 = vpop.f32.mrf.mxu0
  %v1591 = vadd.f32 %v1478, %v1590
  %1592 = vmatprep.mubr.bf16.mxu0 %v610
  %1593 = vmatmul.mubr.bf16.gmra.mxu0 %v609
  %v1594 = vpop.f32.mrf.mxu0
  %v1595 = vadd.f32 %v1482, %v1594
  %v1596 = vpop.f32.mrf.mxu0
  %v1597 = vadd.f32 %v1484, %v1596
  %v1598 = vpop.f32.mrf.mxu0
  %v1599 = vadd.f32 %v1486, %v1598
  %v1600 = vpop.f32.mrf.mxu0
  %v1601 = vadd.f32 %v1488, %v1600
  %1602 = vmatprep.mubr.bf16.mxu0 %v614
  %1603 = vmatmul.mubr.bf16.gmra.mxu0 %v613
  %v1604 = vpop.f32.mrf.mxu0
  %v1605 = vadd.f32 %v1492, %v1604
  %v1606 = vpop.f32.mrf.mxu0
  %v1607 = vadd.f32 %v1494, %v1606
  %v1608 = vpop.f32.mrf.mxu0
  %v1609 = vadd.f32 %v1496, %v1608
  %v1610 = vpop.f32.mrf.mxu0
  %v1611 = vadd.f32 %v1498, %v1610
  %1612 = vmatprep.mubr.bf16.mxu0 %v618
  %1613 = vmatmul.mubr.bf16.gmra.mxu0 %v617
  %v1614 = vpop.f32.mrf.mxu0
  %v1615 = vadd.f32 %v1502, %v1614
  %v1616 = vpop.f32.mrf.mxu0
  %v1617 = vadd.f32 %v1504, %v1616
  %v1618 = vpop.f32.mrf.mxu0
  %v1619 = vadd.f32 %v1506, %v1618
  %v1620 = vpop.f32.mrf.mxu0
  %v1621 = vadd.f32 %v1508, %v1620
  %1622 = vmatprep.mubr.bf16.mxu0 %v622
  %1623 = vmatmul.mubr.bf16.gmra.mxu0 %v621
  %v1624 = vpop.f32.mrf.mxu0
  %v1625 = vadd.f32 %v1512, %v1624
  %v1626 = vpop.f32.mrf.mxu0
  %v1627 = vadd.f32 %v1514, %v1626
  %v1628 = vpop.f32.mrf.mxu0
  %v1629 = vadd.f32 %v1516, %v1628
  %v1630 = vpop.f32.mrf.mxu0
  %v1631 = vadd.f32 %v1518, %v1630
  %1632 = vmatprep.mubr.bf16.mxu0 %v626
  %1633 = vmatmul.mubr.bf16.gmra.mxu0 %v625
  %v1634 = vpop.f32.mrf.mxu0
  %v1635 = vadd.f32 %v1522, %v1634
  %v1636 = vpop.f32.mrf.mxu0
  %v1637 = vadd.f32 %v1524, %v1636
  %v1638 = vpop.f32.mrf.mxu0
  %v1639 = vadd.f32 %v1526, %v1638
  %v1640 = vpop.f32.mrf.mxu0
  %v1641 = vadd.f32 %v1528, %v1640
  %1642 = vdwg.mxu0
  %1643 = vmatprep.subr.bf16.mxu0 %v1192
  %1644 = vmatpush1.bf16.msra.mxu0 %v1191
  %1645 = vmatprep.subr.bf16.mxu0 %v1188
  %1646 = vmatpush1.bf16.msra.mxu0 %v1187
  %1647 = vmatprep.subr.bf16.mxu0 %v1184
  %1648 = vmatpush1.bf16.msra.mxu0 %v1183
  %1649 = vmatprep.subr.bf16.mxu0 %v1180
  %1650 = vmatpush1.bf16.msra.mxu0 %v1179
  %1651 = vmatprep.subr.bf16.mxu0 %v1176
  %1652 = vmatpush1.bf16.msra.mxu0 %v1175
  %1653 = vmatprep.subr.bf16.mxu0 %v1172
  %1654 = vmatpush1.bf16.msra.mxu0 %v1171
  %1655 = vmatprep.subr.bf16.mxu0 %v1168
  %1656 = vmatpush1.bf16.msra.mxu0 %v1167
  %1657 = vmatprep.subr.bf16.mxu0 %v1164
  %1658 = vmatpush1.bf16.msra.mxu0 %v1163
  %1659 = vmatprep.subr.bf16.mxu0 %v1224
  %1660 = vmatpush2.bf16.msra.mxu0 %v1223
  %1661 = vmatprep.subr.bf16.mxu0 %v1220
  %1662 = vmatpush2.bf16.msra.mxu0 %v1219
  %1663 = vmatprep.subr.bf16.mxu0 %v1216
  %1664 = vmatpush2.bf16.msra.mxu0 %v1215
  %1665 = vmatprep.subr.bf16.mxu0 %v1212
  %1666 = vmatpush2.bf16.msra.mxu0 %v1211
  %1667 = vmatprep.subr.bf16.mxu0 %v1208
  %1668 = vmatpush2.bf16.msra.mxu0 %v1207
  %1669 = vmatprep.subr.bf16.mxu0 %v1204
  %1670 = vmatpush2.bf16.msra.mxu0 %v1203
  %1671 = vmatprep.subr.bf16.mxu0 %v1200
  %1672 = vmatpush2.bf16.msra.mxu0 %v1199
  %1673 = vmatprep.subr.bf16.mxu0 %v1196
  %1674 = vmatpush2.bf16.msra.mxu0 %v1195
  %1675 = vmatprep.mubr.bf16.mxu0 %v596
  %1676 = vmatmul.mubr.bf16.gmra.mxu0 %v595
  %v1677 = vpop.f32.mrf.mxu0
  %v1678 = vadd.f32 %v768, %v1677
  %v1679 = vpop.f32.mrf.mxu0
  %v1680 = vadd.f32 %v772, %v1679
  %v1681 = vpop.f32.mrf.mxu0
  %v1682 = vadd.f32 %v768, %v1681
  %v1683 = vpop.f32.mrf.mxu0
  %v1684 = vadd.f32 %v772, %v1683
  %1685 = vmatprep.mubr.bf16.mxu0 %v600
  %1686 = vmatmul.mubr.bf16.gmra.mxu0 %v599
  %v1687 = vpop.f32.mrf.mxu0
  %v1688 = vadd.f32 %v768, %v1687
  %v1689 = vpop.f32.mrf.mxu0
  %v1690 = vadd.f32 %v772, %v1689
  %v1691 = vpop.f32.mrf.mxu0
  %v1692 = vadd.f32 %v768, %v1691
  %v1693 = vpop.f32.mrf.mxu0
  %v1694 = vadd.f32 %v772, %v1693
  %1695 = vmatprep.mubr.bf16.mxu0 %v604
  %1696 = vmatmul.mubr.bf16.gmra.mxu0 %v603
  %v1697 = vpop.f32.mrf.mxu0
  %v1698 = vadd.f32 %v768, %v1697
  %v1699 = vpop.f32.mrf.mxu0
  %v1700 = vadd.f32 %v772, %v1699
  %v1701 = vpop.f32.mrf.mxu0
  %v1702 = vadd.f32 %v768, %v1701
  %v1703 = vpop.f32.mrf.mxu0
  %v1704 = vadd.f32 %v772, %v1703
  %1705 = vmatprep.mubr.bf16.mxu0 %v608
  %1706 = vmatmul.mubr.bf16.gmra.mxu0 %v607
  %v1707 = vpop.f32.mrf.mxu0
  %v1708 = vadd.f32 %v768, %v1707
  %v1709 = vpop.f32.mrf.mxu0
  %v1710 = vadd.f32 %v772, %v1709
  %v1711 = vpop.f32.mrf.mxu0
  %v1712 = vadd.f32 %v768, %v1711
  %v1713 = vpop.f32.mrf.mxu0
  %v1714 = vadd.f32 %v772, %v1713
  %1715 = vmatprep.mubr.bf16.mxu0 %v612
  %1716 = vmatmul.mubr.bf16.gmra.mxu0 %v611
  %v1717 = vpop.f32.mrf.mxu0
  %v1718 = vadd.f32 %v768, %v1717
  %v1719 = vpop.f32.mrf.mxu0
  %v1720 = vadd.f32 %v772, %v1719
  %v1721 = vpop.f32.mrf.mxu0
  %v1722 = vadd.f32 %v768, %v1721
  %v1723 = vpop.f32.mrf.mxu0
  %v1724 = vadd.f32 %v772, %v1723
  %1725 = vmatprep.mubr.bf16.mxu0 %v616
  %1726 = vmatmul.mubr.bf16.gmra.mxu0 %v615
  %v1727 = vpop.f32.mrf.mxu0
  %v1728 = vadd.f32 %v768, %v1727
  %v1729 = vpop.f32.mrf.mxu0
  %v1730 = vadd.f32 %v772, %v1729
  %v1731 = vpop.f32.mrf.mxu0
  %v1732 = vadd.f32 %v768, %v1731
  %v1733 = vpop.f32.mrf.mxu0
  %v1734 = vadd.f32 %v772, %v1733
  %1735 = vmatprep.mubr.bf16.mxu0 %v620
  %1736 = vmatmul.mubr.bf16.gmra.mxu0 %v619
  %v1737 = vpop.f32.mrf.mxu0
  %v1738 = vadd.f32 %v768, %v1737
  %v1739 = vpop.f32.mrf.mxu0
  %v1740 = vadd.f32 %v772, %v1739
  %v1741 = vpop.f32.mrf.mxu0
  %v1742 = vadd.f32 %v768, %v1741
  %v1743 = vpop.f32.mrf.mxu0
  %v1744 = vadd.f32 %v772, %v1743
  %1745 = vmatprep.mubr.bf16.mxu0 %v624
  %1746 = vmatmul.mubr.bf16.gmra.mxu0 %v623
  %v1747 = vpop.f32.mrf.mxu0
  %v1748 = vadd.f32 %v768, %v1747
  %v1749 = vpop.f32.mrf.mxu0
  %v1750 = vadd.f32 %v772, %v1749
  %v1751 = vpop.f32.mrf.mxu0
  %v1752 = vadd.f32 %v768, %v1751
  %v1753 = vpop.f32.mrf.mxu0
  %v1754 = vadd.f32 %v772, %v1753
  %1755 = vdwg.mxu0
  %1756 = vmatprep.subr.bf16.mxu0 %v1256
  %1757 = vmatpush1.bf16.msra.mxu0 %v1255
  %1758 = vmatprep.subr.bf16.mxu0 %v1252
  %1759 = vmatpush1.bf16.msra.mxu0 %v1251
  %1760 = vmatprep.subr.bf16.mxu0 %v1248
  %1761 = vmatpush1.bf16.msra.mxu0 %v1247
  %1762 = vmatprep.subr.bf16.mxu0 %v1244
  %1763 = vmatpush1.bf16.msra.mxu0 %v1243
  %1764 = vmatprep.subr.bf16.mxu0 %v1240
  %1765 = vmatpush1.bf16.msra.mxu0 %v1239
  %1766 = vmatprep.subr.bf16.mxu0 %v1236
  %1767 = vmatpush1.bf16.msra.mxu0 %v1235
  %1768 = vmatprep.subr.bf16.mxu0 %v1232
  %1769 = vmatpush1.bf16.msra.mxu0 %v1231
  %1770 = vmatprep.subr.bf16.mxu0 %v1228
  %1771 = vmatpush1.bf16.msra.mxu0 %v1227
  %1772 = vmatprep.subr.bf16.mxu0 %v1288
  %1773 = vmatpush2.bf16.msra.mxu0 %v1287
  %1774 = vmatprep.subr.bf16.mxu0 %v1284
  %1775 = vmatpush2.bf16.msra.mxu0 %v1283
  %1776 = vmatprep.subr.bf16.mxu0 %v1280
  %1777 = vmatpush2.bf16.msra.mxu0 %v1279
  %1778 = vmatprep.subr.bf16.mxu0 %v1276
  %1779 = vmatpush2.bf16.msra.mxu0 %v1275
  %1780 = vmatprep.subr.bf16.mxu0 %v1272
  %1781 = vmatpush2.bf16.msra.mxu0 %v1271
  %1782 = vmatprep.subr.bf16.mxu0 %v1268
  %1783 = vmatpush2.bf16.msra.mxu0 %v1267
  %1784 = vmatprep.subr.bf16.mxu0 %v1264
  %1785 = vmatpush2.bf16.msra.mxu0 %v1263
  %1786 = vmatprep.subr.bf16.mxu0 %v1260
  %1787 = vmatpush2.bf16.msra.mxu0 %v1259
  %1788 = vmatprep.mubr.bf16.mxu0 %v598
  %1789 = vmatmul.mubr.bf16.gmra.mxu0 %v597
  %v1790 = vpop.f32.mrf.mxu0
  %v1791 = vadd.f32 %v1678, %v1790
  %v1792 = vpop.f32.mrf.mxu0
  %v1793 = vadd.f32 %v1680, %v1792
  %v1794 = vpop.f32.mrf.mxu0
  %v1795 = vadd.f32 %v1682, %v1794
  %v1796 = vpop.f32.mrf.mxu0
  %v1797 = vadd.f32 %v1684, %v1796
  %1798 = vmatprep.mubr.bf16.mxu0 %v602
  %1799 = vmatmul.mubr.bf16.gmra.mxu0 %v601
  %v1800 = vpop.f32.mrf.mxu0
  %v1801 = vadd.f32 %v1688, %v1800
  %v1802 = vpop.f32.mrf.mxu0
  %v1803 = vadd.f32 %v1690, %v1802
  %v1804 = vpop.f32.mrf.mxu0
  %v1805 = vadd.f32 %v1692, %v1804
  %v1806 = vpop.f32.mrf.mxu0
  %v1807 = vadd.f32 %v1694, %v1806
  %1808 = vmatprep.mubr.bf16.mxu0 %v606
  %1809 = vmatmul.mubr.bf16.gmra.mxu0 %v605
  %v1810 = vpop.f32.mrf.mxu0
  %v1811 = vadd.f32 %v1698, %v1810
  %v1812 = vpop.f32.mrf.mxu0
  %v1813 = vadd.f32 %v1700, %v1812
  %v1814 = vpop.f32.mrf.mxu0
  %v1815 = vadd.f32 %v1702, %v1814
  %v1816 = vpop.f32.mrf.mxu0
  %v1817 = vadd.f32 %v1704, %v1816
  %1818 = vmatprep.mubr.bf16.mxu0 %v610
  %1819 = vmatmul.mubr.bf16.gmra.mxu0 %v609
  %v1820 = vpop.f32.mrf.mxu0
  %v1821 = vadd.f32 %v1708, %v1820
  %v1822 = vpop.f32.mrf.mxu0
  %v1823 = vadd.f32 %v1710, %v1822
  %v1824 = vpop.f32.mrf.mxu0
  %v1825 = vadd.f32 %v1712, %v1824
  %v1826 = vpop.f32.mrf.mxu0
  %v1827 = vadd.f32 %v1714, %v1826
  %1828 = vmatprep.mubr.bf16.mxu0 %v614
  %1829 = vmatmul.mubr.bf16.gmra.mxu0 %v613
  %v1830 = vpop.f32.mrf.mxu0
  %v1831 = vadd.f32 %v1718, %v1830
  %v1832 = vpop.f32.mrf.mxu0
  %v1833 = vadd.f32 %v1720, %v1832
  %v1834 = vpop.f32.mrf.mxu0
  %v1835 = vadd.f32 %v1722, %v1834
  %v1836 = vpop.f32.mrf.mxu0
  %v1837 = vadd.f32 %v1724, %v1836
  %1838 = vmatprep.mubr.bf16.mxu0 %v618
  %1839 = vmatmul.mubr.bf16.gmra.mxu0 %v617
  %v1840 = vpop.f32.mrf.mxu0
  %v1841 = vadd.f32 %v1728, %v1840
  %v1842 = vpop.f32.mrf.mxu0
  %v1843 = vadd.f32 %v1730, %v1842
  %v1844 = vpop.f32.mrf.mxu0
  %v1845 = vadd.f32 %v1732, %v1844
  %v1846 = vpop.f32.mrf.mxu0
  %v1847 = vadd.f32 %v1734, %v1846
  %1848 = vmatprep.mubr.bf16.mxu0 %v622
  %1849 = vmatmul.mubr.bf16.gmra.mxu0 %v621
  %v1850 = vpop.f32.mrf.mxu0
  %v1851 = vadd.f32 %v1738, %v1850
  %v1852 = vpop.f32.mrf.mxu0
  %v1853 = vadd.f32 %v1740, %v1852
  %v1854 = vpop.f32.mrf.mxu0
  %v1855 = vadd.f32 %v1742, %v1854
  %v1856 = vpop.f32.mrf.mxu0
  %v1857 = vadd.f32 %v1744, %v1856
  %1858 = vmatprep.mubr.bf16.mxu0 %v626
  %1859 = vmatmul.mubr.bf16.gmra.mxu0 %v625
  %v1860 = vpop.f32.mrf.mxu0
  %v1861 = vadd.f32 %v1748, %v1860
  %v1862 = vpop.f32.mrf.mxu0
  %v1863 = vadd.f32 %v1750, %v1862
  %v1864 = vpop.f32.mrf.mxu0
  %v1865 = vadd.f32 %v1752, %v1864
  %v1866 = vpop.f32.mrf.mxu0
  %v1867 = vadd.f32 %v1754, %v1866
  %1868 = vdwg.mxu0
  %v1869 = vmax.f32 %v1565, 0.0
  %v1870 = vmax.f32 %v1567, 0.0
  %v1871 = vmax.f32 %v1791, 0.0
  %v1872 = vmax.f32 %v1793, 0.0
  %v1873 = vmax.f32 %v1569, 0.0
  %v1874 = vmax.f32 %v1571, 0.0
  %v1875 = vmax.f32 %v1795, 0.0
  %v1876 = vmax.f32 %v1797, 0.0
  %v1877 = vmax.f32 %v1575, 0.0
  %v1878 = vmax.f32 %v1577, 0.0
  %v1879 = vmax.f32 %v1801, 0.0
  %v1880 = vmax.f32 %v1803, 0.0
  %v1881 = vmax.f32 %v1579, 0.0
  %v1882 = vmax.f32 %v1581, 0.0
  %v1883 = vmax.f32 %v1805, 0.0
  %v1884 = vmax.f32 %v1807, 0.0
  %v1885 = vmax.f32 %v1585, 0.0
  %v1886 = vmax.f32 %v1587, 0.0
  %v1887 = vmax.f32 %v1811, 0.0
  %v1888 = vmax.f32 %v1813, 0.0
  %v1889 = vmax.f32 %v1589, 0.0
  %v1890 = vmax.f32 %v1591, 0.0
  %v1891 = vmax.f32 %v1815, 0.0
  %v1892 = vmax.f32 %v1817, 0.0
  %v1893 = vmax.f32 %v1595, 0.0
  %v1894 = vmax.f32 %v1597, 0.0
  %v1895 = vmax.f32 %v1821, 0.0
  %v1896 = vmax.f32 %v1823, 0.0
  %v1897 = vmax.f32 %v1599, 0.0
  %v1898 = vmax.f32 %v1601, 0.0
  %v1899 = vmax.f32 %v1825, 0.0
  %v1900 = vmax.f32 %v1827, 0.0
  %v1901 = vmax.f32 %v1605, 0.0
  %v1902 = vmax.f32 %v1607, 0.0
  %v1903 = vmax.f32 %v1831, 0.0
  %v1904 = vmax.f32 %v1833, 0.0
  %v1905 = vmax.f32 %v1609, 0.0
  %v1906 = vmax.f32 %v1611, 0.0
  %v1907 = vmax.f32 %v1835, 0.0
  %v1908 = vmax.f32 %v1837, 0.0
  %v1909 = vmax.f32 %v1615, 0.0
  %v1910 = vmax.f32 %v1617, 0.0
  %v1911 = vmax.f32 %v1841, 0.0
  %v1912 = vmax.f32 %v1843, 0.0
  %v1913 = vmax.f32 %v1619, 0.0
  %v1914 = vmax.f32 %v1621, 0.0
  %v1915 = vmax.f32 %v1845, 0.0
  %v1916 = vmax.f32 %v1847, 0.0
  %v1917 = vmax.f32 %v1625, 0.0
  %v1918 = vmax.f32 %v1627, 0.0
  %v1919 = vmax.f32 %v1851, 0.0
  %v1920 = vmax.f32 %v1853, 0.0
  %v1921 = vmax.f32 %v1629, 0.0
  %v1922 = vmax.f32 %v1631, 0.0
  %v1923 = vmax.f32 %v1855, 0.0
  %v1924 = vmax.f32 %v1857, 0.0
  %v1925 = vmax.f32 %v1635, 0.0
  %v1926 = vmax.f32 %v1637, 0.0
  %v1927 = vmax.f32 %v1861, 0.0
  %v1928 = vmax.f32 %v1863, 0.0
  %v1929 = vmax.f32 %v1639, 0.0
  %v1930 = vmax.f32 %v1641, 0.0
  %v1931 = vmax.f32 %v1865, 0.0
  %v1932 = vmax.f32 %v1867, 0.0
  %v1933 = vpack.c.bf16 %v1873, %v1869
  %v1934 = vpack.c.bf16 %v1874, %v1870
  %v1935 = vpack.c.bf16 %v1875, %v1871
  %v1936 = vpack.c.bf16 %v1876, %v1872
  %v1937 = vpack.c.bf16 %v1881, %v1877
  %v1938 = vpack.c.bf16 %v1882, %v1878
  %v1939 = vpack.c.bf16 %v1883, %v1879
  %v1940 = vpack.c.bf16 %v1884, %v1880
  %v1941 = vpack.c.bf16 %v1889, %v1885
  %v1942 = vpack.c.bf16 %v1890, %v1886
  %v1943 = vpack.c.bf16 %v1891, %v1887
  %v1944 = vpack.c.bf16 %v1892, %v1888
  %v1945 = vpack.c.bf16 %v1897, %v1893
  %v1946 = vpack.c.bf16 %v1898, %v1894
  %v1947 = vpack.c.bf16 %v1899, %v1895
  %v1948 = vpack.c.bf16 %v1900, %v1896
  %v1949 = vpack.c.bf16 %v1905, %v1901
  %v1950 = vpack.c.bf16 %v1906, %v1902
  %v1951 = vpack.c.bf16 %v1907, %v1903
  %v1952 = vpack.c.bf16 %v1908, %v1904
  %v1953 = vpack.c.bf16 %v1913, %v1909
  %v1954 = vpack.c.bf16 %v1914, %v1910
  %v1955 = vpack.c.bf16 %v1915, %v1911
  %v1956 = vpack.c.bf16 %v1916, %v1912
  %v1957 = vpack.c.bf16 %v1921, %v1917
  %v1958 = vpack.c.bf16 %v1922, %v1918
  %v1959 = vpack.c.bf16 %v1923, %v1919
  %v1960 = vpack.c.bf16 %v1924, %v1920
  %v1961 = vpack.c.bf16 %v1929, %v1925
  %v1962 = vpack.c.bf16 %v1930, %v1926
  %v1963 = vpack.c.bf16 %v1931, %v1927
  %v1964 = vpack.c.bf16 %v1932, %v1928
  %v1965 = vld [vmem:[%s5] sm:$0xf]
  %v1966 = vld [vmem:[%s5 + $0x4] sm:$0xf]
  %v1967 = vld [vmem:[%s5 + $0x8] sm:$0xf]
  %v1968 = vld [vmem:[%s5 + $0xc] sm:$0xf]
  %v1969 = vld [vmem:[%s5 + $0x10] sm:$0xf]
  %v1970 = vld [vmem:[%s5 + $0x14] sm:$0xf]
  %v1971 = vld [vmem:[%s5 + $0x18] sm:$0xf]
  %v1972 = vld [vmem:[%s5 + $0x1c] sm:$0xf]
  %v1973 = vld [vmem:[%s5 + $0x20] sm:$0xf]
  %v1974 = vld [vmem:[%s5 + $0x24] sm:$0xf]
  %v1975 = vld [vmem:[%s5 + $0x28] sm:$0xf]
  %v1976 = vld [vmem:[%s5 + $0x2c] sm:$0xf]
  %v1977 = vld [vmem:[%s5 + $0x30] sm:$0xf]
  %v1978 = vld [vmem:[%s5 + $0x34] sm:$0xf]
  %v1979 = vld [vmem:[%s5 + $0x38] sm:$0xf]
  %v1980 = vld [vmem:[%s5 + $0x3c] sm:$0xf]
  %v1981 = vld [vmem:[%s5 + $0x40] sm:$0xf]
  %v1982 = vld [vmem:[%s5 + $0x44] sm:$0xf]
  %v1983 = vld [vmem:[%s5 + $0x48] sm:$0xf]
  %v1984 = vld [vmem:[%s5 + $0x4c] sm:$0xf]
  %v1985 = vld [vmem:[%s5 + $0x50] sm:$0xf]
  %v1986 = vld [vmem:[%s5 + $0x54] sm:$0xf]
  %v1987 = vld [vmem:[%s5 + $0x58] sm:$0xf]
  %v1988 = vld [vmem:[%s5 + $0x5c] sm:$0xf]
  %v1989 = vld [vmem:[%s5 + $0x60] sm:$0xf]
  %v1990 = vld [vmem:[%s5 + $0x64] sm:$0xf]
  %v1991 = vld [vmem:[%s5 + $0x68] sm:$0xf]
  %v1992 = vld [vmem:[%s5 + $0x6c] sm:$0xf]
  %v1993 = vld [vmem:[%s5 + $0x70] sm:$0xf]
  %v1994 = vld [vmem:[%s5 + $0x74] sm:$0xf]
  %v1995 = vld [vmem:[%s5 + $0x78] sm:$0xf]
  %v1996 = vld [vmem:[%s5 + $0x7c] sm:$0xf]
  %v1997 = vld [vmem:[%s5 + $0x80] sm:$0xf]
  %v1998 = vld [vmem:[%s5 + $0x84] sm:$0xf]
  %v1999 = vld [vmem:[%s5 + $0x88] sm:$0xf]
  %v2000 = vld [vmem:[%s5 + $0x8c] sm:$0xf]
  %v2001 = vld [vmem:[%s5 + $0x90] sm:$0xf]
  %v2002 = vld [vmem:[%s5 + $0x94] sm:$0xf]
  %v2003 = vld [vmem:[%s5 + $0x98] sm:$0xf]
  %v2004 = vld [vmem:[%s5 + $0x9c] sm:$0xf]
  %v2005 = vld [vmem:[%s5 + $0xa0] sm:$0xf]
  %v2006 = vld [vmem:[%s5 + $0xa4] sm:$0xf]
  %v2007 = vld [vmem:[%s5 + $0xa8] sm:$0xf]
  %v2008 = vld [vmem:[%s5 + $0xac] sm:$0xf]
  %v2009 = vld [vmem:[%s5 + $0xb0] sm:$0xf]
  %v2010 = vld [vmem:[%s5 + $0xb4] sm:$0xf]
  %v2011 = vld [vmem:[%s5 + $0xb8] sm:$0xf]
  %v2012 = vld [vmem:[%s5 + $0xbc] sm:$0xf]
  %v2013 = vld [vmem:[%s5 + $0xc0] sm:$0xf]
  %v2014 = vld [vmem:[%s5 + $0xc4] sm:$0xf]
  %v2015 = vld [vmem:[%s5 + $0xc8] sm:$0xf]
  %v2016 = vld [vmem:[%s5 + $0xcc] sm:$0xf]
  %v2017 = vld [vmem:[%s5 + $0xd0] sm:$0xf]
  %v2018 = vld [vmem:[%s5 + $0xd4] sm:$0xf]
  %v2019 = vld [vmem:[%s5 + $0xd8] sm:$0xf]
  %v2020 = vld [vmem:[%s5 + $0xdc] sm:$0xf]
  %v2021 = vld [vmem:[%s5 + $0xe0] sm:$0xf]
  %v2022 = vld [vmem:[%s5 + $0xe4] sm:$0xf]
  %v2023 = vld [vmem:[%s5 + $0xe8] sm:$0xf]
  %v2024 = vld [vmem:[%s5 + $0xec] sm:$0xf]
  %v2025 = vld [vmem:[%s5 + $0xf0] sm:$0xf]
  %v2026 = vld [vmem:[%s5 + $0xf4] sm:$0xf]
  %v2027 = vld [vmem:[%s5 + $0xf8] sm:$0xf]
  %v2028 = vld [vmem:[%s5 + $0xfc] sm:$0xf]
  %v2029 = vld [vmem:[%s6] sm:$0x1]
  %v2031 = vlaneseq
  %v2032 = vshrl.u32 %v2031, 7
  %v2033 = vsub.s32 0, %v2032
  %v2034 = vrot.slane %v2029, %v2033
  %v2100 = vunpack.c.l.b16 %v1965
  %v2101 = vunpack.c.l.b16 %v1966
  %v2102 = vunpack.c.l.b16 %v1967
  %v2103 = vunpack.c.l.b16 %v1968
  %v2104 = vunpack.c.l.b16 %v1969
  %v2105 = vunpack.c.l.b16 %v1970
  %v2106 = vunpack.c.l.b16 %v1971
  %v2107 = vunpack.c.l.b16 %v1972
  %v2108 = vunpack.c.l.b16 %v1973
  %v2109 = vunpack.c.l.b16 %v1974
  %v2110 = vunpack.c.l.b16 %v1975
  %v2111 = vunpack.c.l.b16 %v1976
  %v2112 = vunpack.c.l.b16 %v1977
  %v2113 = vunpack.c.l.b16 %v1978
  %v2114 = vunpack.c.l.b16 %v1979
  %v2115 = vunpack.c.l.b16 %v1980
  %v2116 = vunpack.c.l.b16 %v1981
  %v2117 = vunpack.c.l.b16 %v1982
  %v2118 = vunpack.c.l.b16 %v1983
  %v2119 = vunpack.c.l.b16 %v1984
  %v2120 = vunpack.c.l.b16 %v1985
  %v2121 = vunpack.c.l.b16 %v1986
  %v2122 = vunpack.c.l.b16 %v1987
  %v2123 = vunpack.c.l.b16 %v1988
  %v2124 = vunpack.c.l.b16 %v1989
  %v2125 = vunpack.c.l.b16 %v1990
  %v2126 = vunpack.c.l.b16 %v1991
  %v2127 = vunpack.c.l.b16 %v1992
  %v2128 = vunpack.c.l.b16 %v1993
  %v2129 = vunpack.c.l.b16 %v1994
  %v2130 = vunpack.c.l.b16 %v1995
  %v2131 = vunpack.c.l.b16 %v1996
  %v2132 = vunpack.c.l.b16 %v1997
  %v2133 = vunpack.c.l.b16 %v1998
  %v2134 = vunpack.c.l.b16 %v1999
  %v2135 = vunpack.c.l.b16 %v2000
  %v2136 = vunpack.c.l.b16 %v2001
  %v2137 = vunpack.c.l.b16 %v2002
  %v2138 = vunpack.c.l.b16 %v2003
  %v2139 = vunpack.c.l.b16 %v2004
  %v2140 = vunpack.c.l.b16 %v2005
  %v2141 = vunpack.c.l.b16 %v2006
  %v2142 = vunpack.c.l.b16 %v2007
  %v2143 = vunpack.c.l.b16 %v2008
  %v2144 = vunpack.c.l.b16 %v2009
  %v2145 = vunpack.c.l.b16 %v2010
  %v2146 = vunpack.c.l.b16 %v2011
  %v2147 = vunpack.c.l.b16 %v2012
  %v2148 = vunpack.c.l.b16 %v2013
  %v2149 = vunpack.c.l.b16 %v2014
  %v2150 = vunpack.c.l.b16 %v2015
  %v2151 = vunpack.c.l.b16 %v2016
  %v2152 = vunpack.c.l.b16 %v2017
  %v2153 = vunpack.c.l.b16 %v2018
  %v2154 = vunpack.c.l.b16 %v2019
  %v2155 = vunpack.c.l.b16 %v2020
  %v2156 = vunpack.c.l.b16 %v2021
  %v2157 = vunpack.c.l.b16 %v2022
  %v2158 = vunpack.c.l.b16 %v2023
  %v2159 = vunpack.c.l.b16 %v2024
  %v2160 = vunpack.c.l.b16 %v2025
  %v2161 = vunpack.c.l.b16 %v2026
  %v2162 = vunpack.c.l.b16 %v2027
  %v2163 = vunpack.c.l.b16 %v2028
  %v2164 = vpack.c.b16 %v2101, %v2100
  %v2165 = vpack.c.b16 %v2103, %v2102
  %v2166 = vpack.c.b16 %v2105, %v2104
  %v2167 = vpack.c.b16 %v2107, %v2106
  %v2168 = vpack.c.b16 %v2109, %v2108
  %v2169 = vpack.c.b16 %v2111, %v2110
  %v2170 = vpack.c.b16 %v2113, %v2112
  %v2171 = vpack.c.b16 %v2115, %v2114
  %v2172 = vpack.c.b16 %v2117, %v2116
  %v2173 = vpack.c.b16 %v2119, %v2118
  %v2174 = vpack.c.b16 %v2121, %v2120
  %v2175 = vpack.c.b16 %v2123, %v2122
  %v2176 = vpack.c.b16 %v2125, %v2124
  %v2177 = vpack.c.b16 %v2127, %v2126
  %v2178 = vpack.c.b16 %v2129, %v2128
  %v2179 = vpack.c.b16 %v2131, %v2130
  %v2180 = vpack.c.b16 %v2133, %v2132
  %v2181 = vpack.c.b16 %v2135, %v2134
  %v2182 = vpack.c.b16 %v2137, %v2136
  %v2183 = vpack.c.b16 %v2139, %v2138
  %v2184 = vpack.c.b16 %v2141, %v2140
  %v2185 = vpack.c.b16 %v2143, %v2142
  %v2186 = vpack.c.b16 %v2145, %v2144
  %v2187 = vpack.c.b16 %v2147, %v2146
  %v2188 = vpack.c.b16 %v2149, %v2148
  %v2189 = vpack.c.b16 %v2151, %v2150
  %v2190 = vpack.c.b16 %v2153, %v2152
  %v2191 = vpack.c.b16 %v2155, %v2154
  %v2192 = vpack.c.b16 %v2157, %v2156
  %v2193 = vpack.c.b16 %v2159, %v2158
  %v2194 = vpack.c.b16 %v2161, %v2160
  %v2195 = vpack.c.b16 %v2163, %v2162
  %2228 = vmatprep.subr.bf16.mxu0 0
  %2229 = vmatpush1.bf16.msra.mxu0 %v2171
  %2230 = vmatprep.subr.bf16.mxu0 0
  %2231 = vmatpush1.bf16.msra.mxu0 %v2170
  %2232 = vmatprep.subr.bf16.mxu0 0
  %2233 = vmatpush1.bf16.msra.mxu0 %v2169
  %2234 = vmatprep.subr.bf16.mxu0 0
  %2235 = vmatpush1.bf16.msra.mxu0 %v2168
  %2236 = vmatprep.subr.bf16.mxu0 0
  %2237 = vmatpush1.bf16.msra.mxu0 %v2167
  %2238 = vmatprep.subr.bf16.mxu0 0
  %2239 = vmatpush1.bf16.msra.mxu0 %v2166
  %2240 = vmatprep.subr.bf16.mxu0 0
  %2241 = vmatpush1.bf16.msra.mxu0 %v2165
  %2242 = vmatprep.subr.bf16.mxu0 0
  %2243 = vmatpush1.bf16.msra.mxu0 %v2164
  %2244 = vmatprep.subr.bf16.mxu0 0
  %2245 = vmatpush2.bf16.msra.mxu0 %v2179
  %2246 = vmatprep.subr.bf16.mxu0 0
  %2247 = vmatpush2.bf16.msra.mxu0 %v2178
  %2248 = vmatprep.subr.bf16.mxu0 0
  %2249 = vmatpush2.bf16.msra.mxu0 %v2177
  %2250 = vmatprep.subr.bf16.mxu0 0
  %2251 = vmatpush2.bf16.msra.mxu0 %v2176
  %2252 = vmatprep.subr.bf16.mxu0 0
  %2253 = vmatpush2.bf16.msra.mxu0 %v2175
  %2254 = vmatprep.subr.bf16.mxu0 0
  %2255 = vmatpush2.bf16.msra.mxu0 %v2174
  %2256 = vmatprep.subr.bf16.mxu0 0
  %2257 = vmatpush2.bf16.msra.mxu0 %v2173
  %2258 = vmatprep.subr.bf16.mxu0 0
  %2259 = vmatpush2.bf16.msra.mxu0 %v2172
  %2260 = vmatprep.mubr.bf16.mxu0 %v1934
  %2261 = vmatmul.mubr.bf16.gmra.mxu0 %v1933
  %v2262 = vpop.f32.mrf.mxu0
  %v2263 = vadd.f32 %v2034, %v2262
  %v2264 = vpop.f32.mrf.mxu0
  %v2265 = vpop.f32.mrf.mxu0
  %v2266 = vadd.f32 %v2034, %v2265
  %v2267 = vpop.f32.mrf.mxu0
  %2268 = vmatprep.mubr.bf16.mxu0 %v1938
  %2269 = vmatmul.mubr.bf16.gmra.mxu0 %v1937
  %v2270 = vpop.f32.mrf.mxu0
  %v2271 = vadd.f32 %v2034, %v2270
  %v2272 = vpop.f32.mrf.mxu0
  %v2273 = vpop.f32.mrf.mxu0
  %v2274 = vadd.f32 %v2034, %v2273
  %v2275 = vpop.f32.mrf.mxu0
  %2276 = vmatprep.mubr.bf16.mxu0 %v1942
  %2277 = vmatmul.mubr.bf16.gmra.mxu0 %v1941
  %v2278 = vpop.f32.mrf.mxu0
  %v2279 = vadd.f32 %v2034, %v2278
  %v2280 = vpop.f32.mrf.mxu0
  %v2281 = vpop.f32.mrf.mxu0
  %v2282 = vadd.f32 %v2034, %v2281
  %v2283 = vpop.f32.mrf.mxu0
  %2284 = vmatprep.mubr.bf16.mxu0 %v1946
  %2285 = vmatmul.mubr.bf16.gmra.mxu0 %v1945
  %v2286 = vpop.f32.mrf.mxu0
  %v2287 = vadd.f32 %v2034, %v2286
  %v2288 = vpop.f32.mrf.mxu0
  %v2289 = vpop.f32.mrf.mxu0
  %v2290 = vadd.f32 %v2034, %v2289
  %v2291 = vpop.f32.mrf.mxu0
  %2292 = vmatprep.mubr.bf16.mxu0 %v1950
  %2293 = vmatmul.mubr.bf16.gmra.mxu0 %v1949
  %v2294 = vpop.f32.mrf.mxu0
  %v2295 = vadd.f32 %v2034, %v2294
  %v2296 = vpop.f32.mrf.mxu0
  %v2297 = vpop.f32.mrf.mxu0
  %v2298 = vadd.f32 %v2034, %v2297
  %v2299 = vpop.f32.mrf.mxu0
  %2300 = vmatprep.mubr.bf16.mxu0 %v1954
  %2301 = vmatmul.mubr.bf16.gmra.mxu0 %v1953
  %v2302 = vpop.f32.mrf.mxu0
  %v2303 = vadd.f32 %v2034, %v2302
  %v2304 = vpop.f32.mrf.mxu0
  %v2305 = vpop.f32.mrf.mxu0
  %v2306 = vadd.f32 %v2034, %v2305
  %v2307 = vpop.f32.mrf.mxu0
  %2308 = vmatprep.mubr.bf16.mxu0 %v1958
  %2309 = vmatmul.mubr.bf16.gmra.mxu0 %v1957
  %v2310 = vpop.f32.mrf.mxu0
  %v2311 = vadd.f32 %v2034, %v2310
  %v2312 = vpop.f32.mrf.mxu0
  %v2313 = vpop.f32.mrf.mxu0
  %v2314 = vadd.f32 %v2034, %v2313
  %v2315 = vpop.f32.mrf.mxu0
  %2316 = vmatprep.mubr.bf16.mxu0 %v1962
  %2317 = vmatmul.mubr.bf16.gmra.mxu0 %v1961
  %v2318 = vpop.f32.mrf.mxu0
  %v2319 = vadd.f32 %v2034, %v2318
  %v2320 = vpop.f32.mrf.mxu0
  %v2321 = vpop.f32.mrf.mxu0
  %v2322 = vadd.f32 %v2034, %v2321
  %v2323 = vpop.f32.mrf.mxu0
  %2324 = vdwg.mxu0
  %2325 = vmatprep.subr.bf16.mxu0 0
  %2326 = vmatpush1.bf16.msra.mxu0 %v2187
  %2327 = vmatprep.subr.bf16.mxu0 0
  %2328 = vmatpush1.bf16.msra.mxu0 %v2186
  %2329 = vmatprep.subr.bf16.mxu0 0
  %2330 = vmatpush1.bf16.msra.mxu0 %v2185
  %2331 = vmatprep.subr.bf16.mxu0 0
  %2332 = vmatpush1.bf16.msra.mxu0 %v2184
  %2333 = vmatprep.subr.bf16.mxu0 0
  %2334 = vmatpush1.bf16.msra.mxu0 %v2183
  %2335 = vmatprep.subr.bf16.mxu0 0
  %2336 = vmatpush1.bf16.msra.mxu0 %v2182
  %2337 = vmatprep.subr.bf16.mxu0 0
  %2338 = vmatpush1.bf16.msra.mxu0 %v2181
  %2339 = vmatprep.subr.bf16.mxu0 0
  %2340 = vmatpush1.bf16.msra.mxu0 %v2180
  %2341 = vmatprep.subr.bf16.mxu0 0
  %2342 = vmatpush2.bf16.msra.mxu0 %v2195
  %2343 = vmatprep.subr.bf16.mxu0 0
  %2344 = vmatpush2.bf16.msra.mxu0 %v2194
  %2345 = vmatprep.subr.bf16.mxu0 0
  %2346 = vmatpush2.bf16.msra.mxu0 %v2193
  %2347 = vmatprep.subr.bf16.mxu0 0
  %2348 = vmatpush2.bf16.msra.mxu0 %v2192
  %2349 = vmatprep.subr.bf16.mxu0 0
  %2350 = vmatpush2.bf16.msra.mxu0 %v2191
  %2351 = vmatprep.subr.bf16.mxu0 0
  %2352 = vmatpush2.bf16.msra.mxu0 %v2190
  %2353 = vmatprep.subr.bf16.mxu0 0
  %2354 = vmatpush2.bf16.msra.mxu0 %v2189
  %2355 = vmatprep.subr.bf16.mxu0 0
  %2356 = vmatpush2.bf16.msra.mxu0 %v2188
  %2357 = vmatprep.mubr.bf16.mxu0 %v1936
  %2358 = vmatmul.mubr.bf16.gmra.mxu0 %v1935
  %v2359 = vpop.f32.mrf.mxu0
  %v2360 = vadd.f32 %v2263, %v2359
  %v2361 = vpop.f32.mrf.mxu0
  %v2362 = vpop.f32.mrf.mxu0
  %v2363 = vadd.f32 %v2266, %v2362
  %v2364 = vpop.f32.mrf.mxu0
  %2365 = vmatprep.mubr.bf16.mxu0 %v1940
  %2366 = vmatmul.mubr.bf16.gmra.mxu0 %v1939
  %v2367 = vpop.f32.mrf.mxu0
  %v2368 = vadd.f32 %v2271, %v2367
  %v2369 = vpop.f32.mrf.mxu0
  %v2370 = vpop.f32.mrf.mxu0
  %v2371 = vadd.f32 %v2274, %v2370
  %v2372 = vpop.f32.mrf.mxu0
  %2373 = vmatprep.mubr.bf16.mxu0 %v1944
  %2374 = vmatmul.mubr.bf16.gmra.mxu0 %v1943
  %v2375 = vpop.f32.mrf.mxu0
  %v2376 = vadd.f32 %v2279, %v2375
  %v2377 = vpop.f32.mrf.mxu0
  %v2378 = vpop.f32.mrf.mxu0
  %v2379 = vadd.f32 %v2282, %v2378
  %v2380 = vpop.f32.mrf.mxu0
  %2381 = vmatprep.mubr.bf16.mxu0 %v1948
  %2382 = vmatmul.mubr.bf16.gmra.mxu0 %v1947
  %v2383 = vpop.f32.mrf.mxu0
  %v2384 = vadd.f32 %v2287, %v2383
  %v2385 = vpop.f32.mrf.mxu0
  %v2386 = vpop.f32.mrf.mxu0
  %v2387 = vadd.f32 %v2290, %v2386
  %v2388 = vpop.f32.mrf.mxu0
  %2389 = vmatprep.mubr.bf16.mxu0 %v1952
  %2390 = vmatmul.mubr.bf16.gmra.mxu0 %v1951
  %v2391 = vpop.f32.mrf.mxu0
  %v2392 = vadd.f32 %v2295, %v2391
  %v2393 = vpop.f32.mrf.mxu0
  %v2394 = vpop.f32.mrf.mxu0
  %v2395 = vadd.f32 %v2298, %v2394
  %v2396 = vpop.f32.mrf.mxu0
  %2397 = vmatprep.mubr.bf16.mxu0 %v1956
  %2398 = vmatmul.mubr.bf16.gmra.mxu0 %v1955
  %v2399 = vpop.f32.mrf.mxu0
  %v2400 = vadd.f32 %v2303, %v2399
  %v2401 = vpop.f32.mrf.mxu0
  %v2402 = vpop.f32.mrf.mxu0
  %v2403 = vadd.f32 %v2306, %v2402
  %v2404 = vpop.f32.mrf.mxu0
  %2405 = vmatprep.mubr.bf16.mxu0 %v1960
  %2406 = vmatmul.mubr.bf16.gmra.mxu0 %v1959
  %v2407 = vpop.f32.mrf.mxu0
  %v2408 = vadd.f32 %v2311, %v2407
  %v2409 = vpop.f32.mrf.mxu0
  %v2410 = vpop.f32.mrf.mxu0
  %v2411 = vadd.f32 %v2314, %v2410
  %v2412 = vpop.f32.mrf.mxu0
  %2413 = vmatprep.mubr.bf16.mxu0 %v1964
  %2414 = vmatmul.mubr.bf16.gmra.mxu0 %v1963
  %v2415 = vpop.f32.mrf.mxu0
  %v2416 = vadd.f32 %v2319, %v2415
  %v2417 = vpop.f32.mrf.mxu0
  %v2418 = vpop.f32.mrf.mxu0
  %v2419 = vadd.f32 %v2322, %v2418
  %v2420 = vpop.f32.mrf.mxu0
  %2421 = vdwg.mxu0
  %v2422 = vtanh.pop %v2360
  %v2423 = vtanh.pop %v2363
  %v2424 = vtanh.pop %v2368
  %v2425 = vtanh.pop %v2371
  %v2426 = vtanh.pop %v2376
  %v2427 = vtanh.pop %v2379
  %v2428 = vtanh.pop %v2384
  %v2429 = vtanh.pop %v2387
  %v2430 = vtanh.pop %v2392
  %v2431 = vtanh.pop %v2395
  %v2432 = vtanh.pop %v2400
  %v2433 = vtanh.pop %v2403
  %v2434 = vtanh.pop %v2408
  %v2435 = vtanh.pop %v2411
  %v2436 = vtanh.pop %v2416
  %v2437 = vtanh.pop %v2419
  %2438 = vst [vmem:[%s7] sm:$0xff] %v2422
  %2439 = vst [vmem:[%s7 + $0x8] sm:$0xff] %v2423
  %2440 = vst [vmem:[%s7 + $0x10] sm:$0xff] %v2424
  %2441 = vst [vmem:[%s7 + $0x18] sm:$0xff] %v2425
  %2442 = vst [vmem:[%s7 + $0x20] sm:$0xff] %v2426
  %2443 = vst [vmem:[%s7 + $0x28] sm:$0xff] %v2427
  %2444 = vst [vmem:[%s7 + $0x30] sm:$0xff] %v2428
  %2445 = vst [vmem:[%s7 + $0x38] sm:$0xff] %v2429
  %2446 = vst [vmem:[%s7 + $0x40] sm:$0xff] %v2430
  %2447 = vst [vmem:[%s7 + $0x48] sm:$0xff] %v2431
  %2448 = vst [vmem:[%s7 + $0x50] sm:$0xff] %v2432
  %2449 = vst [vmem:[%s7 + $0x58] sm:$0xff] %v2433
  %2450 = vst [vmem:[%s7 + $0x60] sm:$0xff] %v2434
  %2451 = vst [vmem:[%s7 + $0x68] sm:$0xff] %v2435
  %2452 = vst [vmem:[%s7 + $0x70] sm:$0xff] %v2436
  %2453 = vst [vmem:[%s7 + $0x78] sm:$0xff] %v2437
  // Predicated region
  $region30: #{_forward_impl.1} parent=0 // pred_check
    _
  $region31: #{_forward_impl.1} parent=0 // pred_check_branch
    %2455 = sbr.rel (0) target = $region33
  $region32: #{_forward_impl.1} parent=0 // pred_region
    _
  $region33: #{_forward_impl.1} parent=0 // pred_fallthru
    _
  // Predicated region
  $region34: #{_forward_impl.1} parent=0 // pred_check
    _
  $region35: #{_forward_impl.1} parent=0 // pred_check_branch
    %2457 = sbr.rel (0) target = $region37
  $region36: #{_forward_impl.1} parent=0 // pred_region
    _
  $region37: #{_forward_impl.1} parent=0 // pred_fallthru
    _

</llo_original>
